<compile_context>
chip_gen: v7x
topology: tpu7x:2x2x1
jax: 0.10.0
libtpu: 0.0.40
codegen_flags: <defaults>
</compile_context>

<pallas_src>
import jax
import jax.numpy as jnp
from jax.experimental import pallas as pl
from jax.experimental.pallas import tpu as pltpu


def _sigmoid(v):
    # tanh-form sigmoid: a single EUP transcendental per gate (shared by the
    # kernel and the reference so their numerics match exactly).
    return 0.5 * (jnp.tanh(0.5 * v) + 1.0)


def _gru_kernel(x_ref, wx_ref, wh_ref, b_ref, lw_ref, lb_ref, o_ref):
    f32 = jnp.float32
    B, C = o_ref.shape
    H = lw_ref.shape[0]
    T = x_ref.shape[0] // B

    # ---- Hoisted input projection: one (T*B, F) x (F, 4H) MXU pass + bias. ----
    # Gate columns: [ r | z | n_x | n_h ]; W_x has zeros in the n_h block and
    # W_h has zeros in the n_x block, so a single add per step fuses both.
    xg = jnp.dot(x_ref[...], wx_ref[...], preferred_element_type=f32) + b_ref[...]
    w_h = wh_ref[...]                                    # (H, 4H) bf16, hoisted

    # ---- Serial recurrence: per step only the h-dot + nonlinearities. ----
    h = jnp.zeros((B, H), f32)
    for t in range(T):                                   # static T -> fully unrolled
        g = xg[t * B:(t + 1) * B, :] + jnp.dot(
            h.astype(w_h.dtype), w_h, preferred_element_type=f32)   # (B, 4H) f32
        r = _sigmoid(g[:, 0:H])
        z = _sigmoid(g[:, H:2 * H])
        n = jnp.tanh(g[:, 2 * H:3 * H] + r * g[:, 3 * H:4 * H])     # b_hn inside r*
        h = (1.0 - z) * n + z * h

    # ---- Linear head on the final hidden state + stabilized log_softmax. ----
    logits = jnp.dot(h.astype(lw_ref.dtype), lw_ref[...],
                     preferred_element_type=f32) + lb_ref[...]      # (B, C)
    m = jnp.max(logits, axis=-1, keepdims=True)
    zc = logits - m
    lse = jnp.log(jnp.sum(jnp.exp(zc), axis=-1, keepdims=True))
    o_ref[...] = (zc - lse).astype(o_ref.dtype)


def simple_gru_forward(x, params):
    """x: (B, T, F) float32.  Returns log-probs (B, num_classes) float32."""
    B, T, F = x.shape
    H, C = params["lw"].shape

    # Layout / dtype prep outside the kernel: time-major flattened x so the
    # input projection is one well-filled matmul; bf16 matmul operands for the
    # MXU (f32 accumulation inside the kernel).
    x2d = jnp.transpose(x, (1, 0, 2)).reshape(T * B, F).astype(jnp.bfloat16)
    wx = params["w_x"].astype(jnp.bfloat16)              # (F, 4H)
    wh = params["w_h"].astype(jnp.bfloat16)              # (H, 4H)
    lw = params["lw"].astype(jnp.bfloat16)               # (H, C)

    grid_spec = pltpu.PrefetchScalarGridSpec(
        num_scalar_prefetch=0,
        grid=(1,),                                       # single step: batch folded into M
        in_specs=[
            pl.BlockSpec((T * B, F), lambda i: (0, 0)),  # x, time-major (T*B, F)
            pl.BlockSpec((F, 4 * H), lambda i: (0, 0)),  # input-side GRU weights
            pl.BlockSpec((H, 4 * H), lambda i: (0, 0)),  # hidden-side GRU weights
            pl.BlockSpec((1, 4 * H), lambda i: (0, 0)),  # packed GRU biases
            pl.BlockSpec((H, C), lambda i: (0, 0)),      # linear weight
            pl.BlockSpec((1, C), lambda i: (0, 0)),      # linear bias
        ],
        out_specs=pl.BlockSpec((B, C), lambda i: (0, 0)),
    )
    return pl.pallas_call(
        _gru_kernel,
        out_shape=jax.ShapeDtypeStruct((B, C), jnp.float32),
        grid_spec=grid_spec,
        compiler_params=pltpu.CompilerParams(dimension_semantics=("arbitrary",)),
    )(x2d, wx, wh, params["b_row"], lw, params["lb"])


def init_params(key, input_features, hidden_size, num_classes):
    """PyTorch-layout GRU + Linear params (uniform(-1/sqrt(H), 1/sqrt(H)) like
    nn.GRU / nn.Linear defaults) plus the packed forms the kernel consumes."""
    F, H, C = input_features, hidden_size, num_classes
    ks = jax.random.split(key, 6)
    s = 1.0 / float(H) ** 0.5

    w_ih = jax.random.uniform(ks[0], (3 * H, F), jnp.float32, -s, s)   # rows: r|z|n
    w_hh = jax.random.uniform(ks[1], (3 * H, H), jnp.float32, -s, s)
    b_ih = jax.random.uniform(ks[2], (3 * H,), jnp.float32, -s, s)
    b_hh = jax.random.uniform(ks[3], (3 * H,), jnp.float32, -s, s)
    lin_w = jax.random.uniform(ks[4], (C, H), jnp.float32, -s, s)
    lin_b = jax.random.uniform(ks[5], (C,), jnp.float32, -s, s)

    W_ir, W_iz, W_in = w_ih[:H], w_ih[H:2 * H], w_ih[2 * H:]
    W_hr, W_hz, W_hn = w_hh[:H], w_hh[H:2 * H], w_hh[2 * H:]
    # Input-side weights, gate columns [ r | z | n_x | 0 ]  -> (F, 4H)
    w_x = jnp.concatenate(
        [W_ir.T, W_iz.T, W_in.T, jnp.zeros((F, H), jnp.float32)], axis=1)
    # Hidden-side weights, gate columns [ r | z | 0 | n_h ] -> (H, 4H)
    w_h = jnp.concatenate(
        [W_hr.T, W_hz.T, jnp.zeros((H, H), jnp.float32), W_hn.T], axis=1)
    # Packed biases: [ b_ir+b_hr | b_iz+b_hz | b_in | b_hn ] -> (1, 4H)
    b_row = jnp.concatenate([b_ih[:H] + b_hh[:H],
                             b_ih[H:2 * H] + b_hh[H:2 * H],
                             b_ih[2 * H:],                     # b_in (outside r*)
                             b_hh[2 * H:]])[None, :]           # b_hn (inside r*)

    return {
        # raw PyTorch-layout params (used by the pure-JAX reference)
        "weight_ih": w_ih, "weight_hh": w_hh, "bias_ih": b_ih, "bias_hh": b_hh,
        "linear_w": lin_w, "linear_b": lin_b,
        # packed params (used by the kernel)
        "w_x": w_x, "w_h": w_h, "b_row": b_row,
        "lw": lin_w.T, "lb": lin_b[None, :],
    }


def _ref_forward(x, p):
    """Pure-JAX, PyTorch-faithful GRU -> Linear -> LogSoftmax using the raw
    (unpacked) weights, mirroring the kernel's bf16-operand / f32-accum precision
    and tanh-form sigmoid."""
    bf16 = jnp.bfloat16
    B = x.shape[0]
    H = p["weight_hh"].shape[1]
    w_ih_t = p["weight_ih"].astype(bf16).T    # (F, 3H)
    w_hh_t = p["weight_hh"].astype(bf16).T    # (H, 3H)
    b_ih, b_hh = p["bias_ih"], p["bias_hh"]

    def step(h, x_t):
        gi = jnp.dot(x_t, w_ih_t, preferred_element_type=jnp.float32) + b_ih
        gh = jnp.dot(h.astype(bf16), w_hh_t, preferred_element_type=jnp.float32) + b_hh
        r = _sigmoid(gi[:, :H] + gh[:, :H])
        z = _sigmoid(gi[:, H:2 * H] + gh[:, H:2 * H])
        n = jnp.tanh(gi[:, 2 * H:] + r * gh[:, 2 * H:])
        return (1.0 - z) * n + z * h, None

    xs = jnp.transpose(x.astype(bf16), (1, 0, 2))             # (T, B, F)
    h_last, _ = jax.lax.scan(step, jnp.zeros((B, H), jnp.float32), xs)
    logits = jnp.dot(h_last.astype(bf16), p["linear_w"].astype(bf16).T,
                     preferred_element_type=jnp.float32) + p["linear_b"]
    return jax.nn.log_softmax(logits, axis=-1)


if __name__ == "__main__":
    B, T = 2, 16              # batch, sequence length
    F, H, C = 8, 32, 8        # input_features, hidden_size, num_classes
    key = jax.random.PRNGKey(0)
    kx, kp = jax.random.split(key)

    x = jax.random.normal(kx, (B, T, F), jnp.float32)   # module input (B, T, F)
    params = init_params(kp, F, H, C)

    out = simple_gru_forward(x, params)
    out = jax.block_until_ready(out)

    ref = _ref_forward(x, params)
    assert out.shape == (B, C)
    assert bool(jnp.all(jnp.isfinite(out)))
    assert jnp.allclose(out, ref, rtol=1e-2, atol=1e-2), (out, ref)

    print("KERNEL_OK")
</pallas_src>

<mosaic_0001>
module attributes {stable_mosaic.version = 11 : i64} {
  func.func @_gru_kernel(%arg0: i32, %arg1: memref<32x8xbf16, #tpu.memory_space<vmem>>, %arg2: memref<8x128xbf16, #tpu.memory_space<vmem>>, %arg3: memref<32x128xbf16, #tpu.memory_space<vmem>>, %arg4: memref<1x128xf32, #tpu.memory_space<vmem>>, %arg5: memref<32x8xbf16, #tpu.memory_space<vmem>>, %arg6: memref<1x8xf32, #tpu.memory_space<vmem>>, %arg7: memref<2x8xf32, #tpu.memory_space<vmem>>) attributes {dimension_semantics = [#tpu.dimension_semantics<arbitrary>], iteration_bounds = array<i64: 1>, scalar_prefetch = 0 : i64, scratch_operands = 0 : i64, tpu.core_type = #tpu.core_type<tc>, window_params = [{pipeline_mode = #tpu.pipeline_mode<synchronous>, transform_indices = @transform_0, window_bounds = array<i64: 32, 8>}, {pipeline_mode = #tpu.pipeline_mode<synchronous>, transform_indices = @transform_1, window_bounds = array<i64: 8, 128>}, {pipeline_mode = #tpu.pipeline_mode<synchronous>, transform_indices = @transform_2, window_bounds = array<i64: 32, 128>}, {pipeline_mode = #tpu.pipeline_mode<synchronous>, transform_indices = @transform_3, window_bounds = array<i64: 1, 128>}, {pipeline_mode = #tpu.pipeline_mode<synchronous>, transform_indices = @transform_4, window_bounds = array<i64: 32, 8>}, {pipeline_mode = #tpu.pipeline_mode<synchronous>, transform_indices = @transform_5, window_bounds = array<i64: 1, 8>}, {pipeline_mode = #tpu.pipeline_mode<synchronous>, transform_indices = @transform_6, window_bounds = array<i64: 2, 8>}]} {
    %c0 = arith.constant 0 : index
    %c0_0 = arith.constant 0 : index
    %0 = vector.load %arg1[%c0, %c0_0] : memref<32x8xbf16, #tpu.memory_space<vmem>>, vector<32x8xbf16>
    %c0_1 = arith.constant 0 : index
    %c0_2 = arith.constant 0 : index
    %1 = vector.load %arg2[%c0_1, %c0_2] : memref<8x128xbf16, #tpu.memory_space<vmem>>, vector<8x128xbf16>
    %cst = arith.constant dense<0.000000e+00> : vector<32x128xf32>
    %2 = tpu.matmul %0, %1, %cst {dimension_numbers = #tpu.dot_dimension_numbers<[1], [0], [0], [1], [0, 0, 1, 1], [], []>} : vector<32x8xbf16>, vector<8x128xbf16>, vector<32x128xf32> -> vector<32x128xf32>
    %c0_3 = arith.constant 0 : index
    %c0_4 = arith.constant 0 : index
    %3 = vector.load %arg4[%c0_3, %c0_4] : memref<1x128xf32, #tpu.memory_space<vmem>>, vector<1x128xf32>
    %4 = vector.broadcast %3 : vector<1x128xf32> to vector<32x128xf32>
    %5 = arith.addf %2, %4 : vector<32x128xf32>
    %c0_5 = arith.constant 0 : index
    %c0_6 = arith.constant 0 : index
    %6 = vector.load %arg3[%c0_5, %c0_6] : memref<32x128xbf16, #tpu.memory_space<vmem>>, vector<32x128xbf16>
    %cst_7 = arith.constant 0.000000e+00 : f32
    %7 = vector.broadcast %cst_7 : f32 to vector<2x32xf32>
    %8 = vector.extract_strided_slice %5 {offsets = [0, 0], sizes = [2, 128], strides = [1, 1]} : vector<32x128xf32> to vector<2x128xf32>
    %9 = arith.truncf %7 : vector<2x32xf32> to vector<2x32xbf16>
    %cst_8 = arith.constant dense<0.000000e+00> : vector<2x128xf32>
    %10 = tpu.matmul %9, %6, %cst_8 {dimension_numbers = #tpu.dot_dimension_numbers<[1], [0], [0], [1], [0, 0, 1, 1], [], []>} : vector<2x32xbf16>, vector<32x128xbf16>, vector<2x128xf32> -> vector<2x128xf32>
    %11 = arith.addf %8, %10 : vector<2x128xf32>
    %12 = vector.extract_strided_slice %11 {offsets = [0, 0], sizes = [2, 32], strides = [1, 1]} : vector<2x128xf32> to vector<2x32xf32>
    %cst_9 = arith.constant 5.000000e-01 : f32
    %13 = vector.broadcast %cst_9 : f32 to vector<2x32xf32>
    %14 = arith.mulf %13, %12 : vector<2x32xf32>
    %15 = math.tanh %14 : vector<2x32xf32>
    %cst_10 = arith.constant 1.000000e+00 : f32
    %16 = vector.broadcast %cst_10 : f32 to vector<2x32xf32>
    %17 = arith.addf %15, %16 : vector<2x32xf32>
    %cst_11 = arith.constant 5.000000e-01 : f32
    %18 = vector.broadcast %cst_11 : f32 to vector<2x32xf32>
    %19 = arith.mulf %18, %17 : vector<2x32xf32>
    %20 = vector.extract_strided_slice %11 {offsets = [0, 32], sizes = [2, 32], strides = [1, 1]} : vector<2x128xf32> to vector<2x32xf32>
    %cst_12 = arith.constant 5.000000e-01 : f32
    %21 = vector.broadcast %cst_12 : f32 to vector<2x32xf32>
    %22 = arith.mulf %21, %20 : vector<2x32xf32>
    %23 = math.tanh %22 : vector<2x32xf32>
    %cst_13 = arith.constant 1.000000e+00 : f32
    %24 = vector.broadcast %cst_13 : f32 to vector<2x32xf32>
    %25 = arith.addf %23, %24 : vector<2x32xf32>
    %cst_14 = arith.constant 5.000000e-01 : f32
    %26 = vector.broadcast %cst_14 : f32 to vector<2x32xf32>
    %27 = arith.mulf %26, %25 : vector<2x32xf32>
    %28 = vector.extract_strided_slice %11 {offsets = [0, 64], sizes = [2, 32], strides = [1, 1]} : vector<2x128xf32> to vector<2x32xf32>
    %29 = vector.extract_strided_slice %11 {offsets = [0, 96], sizes = [2, 32], strides = [1, 1]} : vector<2x128xf32> to vector<2x32xf32>
    %30 = arith.mulf %19, %29 : vector<2x32xf32>
    %31 = arith.addf %28, %30 : vector<2x32xf32>
    %32 = math.tanh %31 : vector<2x32xf32>
    %cst_15 = arith.constant 1.000000e+00 : f32
    %33 = vector.broadcast %cst_15 : f32 to vector<2x32xf32>
    %34 = arith.subf %33, %27 : vector<2x32xf32>
    %35 = arith.mulf %34, %32 : vector<2x32xf32>
    %36 = arith.mulf %27, %7 : vector<2x32xf32>
    %37 = arith.addf %35, %36 : vector<2x32xf32>
    %38 = vector.extract_strided_slice %5 {offsets = [2, 0], sizes = [2, 128], strides = [1, 1]} : vector<32x128xf32> to vector<2x128xf32>
    %39 = arith.truncf %37 : vector<2x32xf32> to vector<2x32xbf16>
    %cst_16 = arith.constant dense<0.000000e+00> : vector<2x128xf32>
    %40 = tpu.matmul %39, %6, %cst_16 {dimension_numbers = #tpu.dot_dimension_numbers<[1], [0], [0], [1], [0, 0, 1, 1], [], []>} : vector<2x32xbf16>, vector<32x128xbf16>, vector<2x128xf32> -> vector<2x128xf32>
    %41 = arith.addf %38, %40 : vector<2x128xf32>
    %42 = vector.extract_strided_slice %41 {offsets = [0, 0], sizes = [2, 32], strides = [1, 1]} : vector<2x128xf32> to vector<2x32xf32>
    %cst_17 = arith.constant 5.000000e-01 : f32
    %43 = vector.broadcast %cst_17 : f32 to vector<2x32xf32>
    %44 = arith.mulf %43, %42 : vector<2x32xf32>
    %45 = math.tanh %44 : vector<2x32xf32>
    %cst_18 = arith.constant 1.000000e+00 : f32
    %46 = vector.broadcast %cst_18 : f32 to vector<2x32xf32>
    %47 = arith.addf %45, %46 : vector<2x32xf32>
    %cst_19 = arith.constant 5.000000e-01 : f32
    %48 = vector.broadcast %cst_19 : f32 to vector<2x32xf32>
    %49 = arith.mulf %48, %47 : vector<2x32xf32>
    %50 = vector.extract_strided_slice %41 {offsets = [0, 32], sizes = [2, 32], strides = [1, 1]} : vector<2x128xf32> to vector<2x32xf32>
    %cst_20 = arith.constant 5.000000e-01 : f32
    %51 = vector.broadcast %cst_20 : f32 to vector<2x32xf32>
    %52 = arith.mulf %51, %50 : vector<2x32xf32>
    %53 = math.tanh %52 : vector<2x32xf32>
    %cst_21 = arith.constant 1.000000e+00 : f32
    %54 = vector.broadcast %cst_21 : f32 to vector<2x32xf32>
    %55 = arith.addf %53, %54 : vector<2x32xf32>
    %cst_22 = arith.constant 5.000000e-01 : f32
    %56 = vector.broadcast %cst_22 : f32 to vector<2x32xf32>
    %57 = arith.mulf %56, %55 : vector<2x32xf32>
    %58 = vector.extract_strided_slice %41 {offsets = [0, 64], sizes = [2, 32], strides = [1, 1]} : vector<2x128xf32> to vector<2x32xf32>
    %59 = vector.extract_strided_slice %41 {offsets = [0, 96], sizes = [2, 32], strides = [1, 1]} : vector<2x128xf32> to vector<2x32xf32>
    %60 = arith.mulf %49, %59 : vector<2x32xf32>
    %61 = arith.addf %58, %60 : vector<2x32xf32>
    %62 = math.tanh %61 : vector<2x32xf32>
    %cst_23 = arith.constant 1.000000e+00 : f32
    %63 = vector.broadcast %cst_23 : f32 to vector<2x32xf32>
    %64 = arith.subf %63, %57 : vector<2x32xf32>
    %65 = arith.mulf %64, %62 : vector<2x32xf32>
    %66 = arith.mulf %57, %37 : vector<2x32xf32>
    %67 = arith.addf %65, %66 : vector<2x32xf32>
    %68 = vector.extract_strided_slice %5 {offsets = [4, 0], sizes = [2, 128], strides = [1, 1]} : vector<32x128xf32> to vector<2x128xf32>
    %69 = arith.truncf %67 : vector<2x32xf32> to vector<2x32xbf16>
    %cst_24 = arith.constant dense<0.000000e+00> : vector<2x128xf32>
    %70 = tpu.matmul %69, %6, %cst_24 {dimension_numbers = #tpu.dot_dimension_numbers<[1], [0], [0], [1], [0, 0, 1, 1], [], []>} : vector<2x32xbf16>, vector<32x128xbf16>, vector<2x128xf32> -> vector<2x128xf32>
    %71 = arith.addf %68, %70 : vector<2x128xf32>
    %72 = vector.extract_strided_slice %71 {offsets = [0, 0], sizes = [2, 32], strides = [1, 1]} : vector<2x128xf32> to vector<2x32xf32>
    %cst_25 = arith.constant 5.000000e-01 : f32
    %73 = vector.broadcast %cst_25 : f32 to vector<2x32xf32>
    %74 = arith.mulf %73, %72 : vector<2x32xf32>
    %75 = math.tanh %74 : vector<2x32xf32>
    %cst_26 = arith.constant 1.000000e+00 : f32
    %76 = vector.broadcast %cst_26 : f32 to vector<2x32xf32>
    %77 = arith.addf %75, %76 : vector<2x32xf32>
    %cst_27 = arith.constant 5.000000e-01 : f32
    %78 = vector.broadcast %cst_27 : f32 to vector<2x32xf32>
    %79 = arith.mulf %78, %77 : vector<2x32xf32>
    %80 = vector.extract_strided_slice %71 {offsets = [0, 32], sizes = [2, 32], strides = [1, 1]} : vector<2x128xf32> to vector<2x32xf32>
    %cst_28 = arith.constant 5.000000e-01 : f32
    %81 = vector.broadcast %cst_28 : f32 to vector<2x32xf32>
    %82 = arith.mulf %81, %80 : vector<2x32xf32>
    %83 = math.tanh %82 : vector<2x32xf32>
    %cst_29 = arith.constant 1.000000e+00 : f32
    %84 = vector.broadcast %cst_29 : f32 to vector<2x32xf32>
    %85 = arith.addf %83, %84 : vector<2x32xf32>
    %cst_30 = arith.constant 5.000000e-01 : f32
    %86 = vector.broadcast %cst_30 : f32 to vector<2x32xf32>
    %87 = arith.mulf %86, %85 : vector<2x32xf32>
    %88 = vector.extract_strided_slice %71 {offsets = [0, 64], sizes = [2, 32], strides = [1, 1]} : vector<2x128xf32> to vector<2x32xf32>
    %89 = vector.extract_strided_slice %71 {offsets = [0, 96], sizes = [2, 32], strides = [1, 1]} : vector<2x128xf32> to vector<2x32xf32>
    %90 = arith.mulf %79, %89 : vector<2x32xf32>
    %91 = arith.addf %88, %90 : vector<2x32xf32>
    %92 = math.tanh %91 : vector<2x32xf32>
    %cst_31 = arith.constant 1.000000e+00 : f32
    %93 = vector.broadcast %cst_31 : f32 to vector<2x32xf32>
    %94 = arith.subf %93, %87 : vector<2x32xf32>
    %95 = arith.mulf %94, %92 : vector<2x32xf32>
    %96 = arith.mulf %87, %67 : vector<2x32xf32>
    %97 = arith.addf %95, %96 : vector<2x32xf32>
    %98 = vector.extract_strided_slice %5 {offsets = [6, 0], sizes = [2, 128], strides = [1, 1]} : vector<32x128xf32> to vector<2x128xf32>
    %99 = arith.truncf %97 : vector<2x32xf32> to vector<2x32xbf16>
    %cst_32 = arith.constant dense<0.000000e+00> : vector<2x128xf32>
    %100 = tpu.matmul %99, %6, %cst_32 {dimension_numbers = #tpu.dot_dimension_numbers<[1], [0], [0], [1], [0, 0, 1, 1], [], []>} : vector<2x32xbf16>, vector<32x128xbf16>, vector<2x128xf32> -> vector<2x128xf32>
    %101 = arith.addf %98, %100 : vector<2x128xf32>
    %102 = vector.extract_strided_slice %101 {offsets = [0, 0], sizes = [2, 32], strides = [1, 1]} : vector<2x128xf32> to vector<2x32xf32>
    %cst_33 = arith.constant 5.000000e-01 : f32
    %103 = vector.broadcast %cst_33 : f32 to vector<2x32xf32>
    %104 = arith.mulf %103, %102 : vector<2x32xf32>
    %105 = math.tanh %104 : vector<2x32xf32>
    %cst_34 = arith.constant 1.000000e+00 : f32
    %106 = vector.broadcast %cst_34 : f32 to vector<2x32xf32>
    %107 = arith.addf %105, %106 : vector<2x32xf32>
    %cst_35 = arith.constant 5.000000e-01 : f32
    %108 = vector.broadcast %cst_35 : f32 to vector<2x32xf32>
    %109 = arith.mulf %108, %107 : vector<2x32xf32>
    %110 = vector.extract_strided_slice %101 {offsets = [0, 32], sizes = [2, 32], strides = [1, 1]} : vector<2x128xf32> to vector<2x32xf32>
    %cst_36 = arith.constant 5.000000e-01 : f32
    %111 = vector.broadcast %cst_36 : f32 to vector<2x32xf32>
    %112 = arith.mulf %111, %110 : vector<2x32xf32>
    %113 = math.tanh %112 : vector<2x32xf32>
    %cst_37 = arith.constant 1.000000e+00 : f32
    %114 = vector.broadcast %cst_37 : f32 to vector<2x32xf32>
    %115 = arith.addf %113, %114 : vector<2x32xf32>
    %cst_38 = arith.constant 5.000000e-01 : f32
    %116 = vector.broadcast %cst_38 : f32 to vector<2x32xf32>
    %117 = arith.mulf %116, %115 : vector<2x32xf32>
    %118 = vector.extract_strided_slice %101 {offsets = [0, 64], sizes = [2, 32], strides = [1, 1]} : vector<2x128xf32> to vector<2x32xf32>
    %119 = vector.extract_strided_slice %101 {offsets = [0, 96], sizes = [2, 32], strides = [1, 1]} : vector<2x128xf32> to vector<2x32xf32>
    %120 = arith.mulf %109, %119 : vector<2x32xf32>
    %121 = arith.addf %118, %120 : vector<2x32xf32>
    %122 = math.tanh %121 : vector<2x32xf32>
    %cst_39 = arith.constant 1.000000e+00 : f32
    %123 = vector.broadcast %cst_39 : f32 to vector<2x32xf32>
    %124 = arith.subf %123, %117 : vector<2x32xf32>
    %125 = arith.mulf %124, %122 : vector<2x32xf32>
    %126 = arith.mulf %117, %97 : vector<2x32xf32>
    %127 = arith.addf %125, %126 : vector<2x32xf32>
    %128 = vector.extract_strided_slice %5 {offsets = [8, 0], sizes = [2, 128], strides = [1, 1]} : vector<32x128xf32> to vector<2x128xf32>
    %129 = arith.truncf %127 : vector<2x32xf32> to vector<2x32xbf16>
    %cst_40 = arith.constant dense<0.000000e+00> : vector<2x128xf32>
    %130 = tpu.matmul %129, %6, %cst_40 {dimension_numbers = #tpu.dot_dimension_numbers<[1], [0], [0], [1], [0, 0, 1, 1], [], []>} : vector<2x32xbf16>, vector<32x128xbf16>, vector<2x128xf32> -> vector<2x128xf32>
    %131 = arith.addf %128, %130 : vector<2x128xf32>
    %132 = vector.extract_strided_slice %131 {offsets = [0, 0], sizes = [2, 32], strides = [1, 1]} : vector<2x128xf32> to vector<2x32xf32>
    %cst_41 = arith.constant 5.000000e-01 : f32
    %133 = vector.broadcast %cst_41 : f32 to vector<2x32xf32>
    %134 = arith.mulf %133, %132 : vector<2x32xf32>
    %135 = math.tanh %134 : vector<2x32xf32>
    %cst_42 = arith.constant 1.000000e+00 : f32
    %136 = vector.broadcast %cst_42 : f32 to vector<2x32xf32>
    %137 = arith.addf %135, %136 : vector<2x32xf32>
    %cst_43 = arith.constant 5.000000e-01 : f32
    %138 = vector.broadcast %cst_43 : f32 to vector<2x32xf32>
    %139 = arith.mulf %138, %137 : vector<2x32xf32>
    %140 = vector.extract_strided_slice %131 {offsets = [0, 32], sizes = [2, 32], strides = [1, 1]} : vector<2x128xf32> to vector<2x32xf32>
    %cst_44 = arith.constant 5.000000e-01 : f32
    %141 = vector.broadcast %cst_44 : f32 to vector<2x32xf32>
    %142 = arith.mulf %141, %140 : vector<2x32xf32>
    %143 = math.tanh %142 : vector<2x32xf32>
    %cst_45 = arith.constant 1.000000e+00 : f32
    %144 = vector.broadcast %cst_45 : f32 to vector<2x32xf32>
    %145 = arith.addf %143, %144 : vector<2x32xf32>
    %cst_46 = arith.constant 5.000000e-01 : f32
    %146 = vector.broadcast %cst_46 : f32 to vector<2x32xf32>
    %147 = arith.mulf %146, %145 : vector<2x32xf32>
    %148 = vector.extract_strided_slice %131 {offsets = [0, 64], sizes = [2, 32], strides = [1, 1]} : vector<2x128xf32> to vector<2x32xf32>
    %149 = vector.extract_strided_slice %131 {offsets = [0, 96], sizes = [2, 32], strides = [1, 1]} : vector<2x128xf32> to vector<2x32xf32>
    %150 = arith.mulf %139, %149 : vector<2x32xf32>
    %151 = arith.addf %148, %150 : vector<2x32xf32>
    %152 = math.tanh %151 : vector<2x32xf32>
    %cst_47 = arith.constant 1.000000e+00 : f32
    %153 = vector.broadcast %cst_47 : f32 to vector<2x32xf32>
    %154 = arith.subf %153, %147 : vector<2x32xf32>
    %155 = arith.mulf %154, %152 : vector<2x32xf32>
    %156 = arith.mulf %147, %127 : vector<2x32xf32>
    %157 = arith.addf %155, %156 : vector<2x32xf32>
    %158 = vector.extract_strided_slice %5 {offsets = [10, 0], sizes = [2, 128], strides = [1, 1]} : vector<32x128xf32> to vector<2x128xf32>
    %159 = arith.truncf %157 : vector<2x32xf32> to vector<2x32xbf16>
    %cst_48 = arith.constant dense<0.000000e+00> : vector<2x128xf32>
    %160 = tpu.matmul %159, %6, %cst_48 {dimension_numbers = #tpu.dot_dimension_numbers<[1], [0], [0], [1], [0, 0, 1, 1], [], []>} : vector<2x32xbf16>, vector<32x128xbf16>, vector<2x128xf32> -> vector<2x128xf32>
    %161 = arith.addf %158, %160 : vector<2x128xf32>
    %162 = vector.extract_strided_slice %161 {offsets = [0, 0], sizes = [2, 32], strides = [1, 1]} : vector<2x128xf32> to vector<2x32xf32>
    %cst_49 = arith.constant 5.000000e-01 : f32
    %163 = vector.broadcast %cst_49 : f32 to vector<2x32xf32>
    %164 = arith.mulf %163, %162 : vector<2x32xf32>
    %165 = math.tanh %164 : vector<2x32xf32>
    %cst_50 = arith.constant 1.000000e+00 : f32
    %166 = vector.broadcast %cst_50 : f32 to vector<2x32xf32>
    %167 = arith.addf %165, %166 : vector<2x32xf32>
    %cst_51 = arith.constant 5.000000e-01 : f32
    %168 = vector.broadcast %cst_51 : f32 to vector<2x32xf32>
    %169 = arith.mulf %168, %167 : vector<2x32xf32>
    %170 = vector.extract_strided_slice %161 {offsets = [0, 32], sizes = [2, 32], strides = [1, 1]} : vector<2x128xf32> to vector<2x32xf32>
    %cst_52 = arith.constant 5.000000e-01 : f32
    %171 = vector.broadcast %cst_52 : f32 to vector<2x32xf32>
    %172 = arith.mulf %171, %170 : vector<2x32xf32>
    %173 = math.tanh %172 : vector<2x32xf32>
    %cst_53 = arith.constant 1.000000e+00 : f32
    %174 = vector.broadcast %cst_53 : f32 to vector<2x32xf32>
    %175 = arith.addf %173, %174 : vector<2x32xf32>
    %cst_54 = arith.constant 5.000000e-01 : f32
    %176 = vector.broadcast %cst_54 : f32 to vector<2x32xf32>
    %177 = arith.mulf %176, %175 : vector<2x32xf32>
    %178 = vector.extract_strided_slice %161 {offsets = [0, 64], sizes = [2, 32], strides = [1, 1]} : vector<2x128xf32> to vector<2x32xf32>
    %179 = vector.extract_strided_slice %161 {offsets = [0, 96], sizes = [2, 32], strides = [1, 1]} : vector<2x128xf32> to vector<2x32xf32>
    %180 = arith.mulf %169, %179 : vector<2x32xf32>
    %181 = arith.addf %178, %180 : vector<2x32xf32>
    %182 = math.tanh %181 : vector<2x32xf32>
    %cst_55 = arith.constant 1.000000e+00 : f32
    %183 = vector.broadcast %cst_55 : f32 to vector<2x32xf32>
    %184 = arith.subf %183, %177 : vector<2x32xf32>
    %185 = arith.mulf %184, %182 : vector<2x32xf32>
    %186 = arith.mulf %177, %157 : vector<2x32xf32>
    %187 = arith.addf %185, %186 : vector<2x32xf32>
    %188 = vector.extract_strided_slice %5 {offsets = [12, 0], sizes = [2, 128], strides = [1, 1]} : vector<32x128xf32> to vector<2x128xf32>
    %189 = arith.truncf %187 : vector<2x32xf32> to vector<2x32xbf16>
    %cst_56 = arith.constant dense<0.000000e+00> : vector<2x128xf32>
    %190 = tpu.matmul %189, %6, %cst_56 {dimension_numbers = #tpu.dot_dimension_numbers<[1], [0], [0], [1], [0, 0, 1, 1], [], []>} : vector<2x32xbf16>, vector<32x128xbf16>, vector<2x128xf32> -> vector<2x128xf32>
    %191 = arith.addf %188, %190 : vector<2x128xf32>
    %192 = vector.extract_strided_slice %191 {offsets = [0, 0], sizes = [2, 32], strides = [1, 1]} : vector<2x128xf32> to vector<2x32xf32>
    %cst_57 = arith.constant 5.000000e-01 : f32
    %193 = vector.broadcast %cst_57 : f32 to vector<2x32xf32>
    %194 = arith.mulf %193, %192 : vector<2x32xf32>
    %195 = math.tanh %194 : vector<2x32xf32>
    %cst_58 = arith.constant 1.000000e+00 : f32
    %196 = vector.broadcast %cst_58 : f32 to vector<2x32xf32>
    %197 = arith.addf %195, %196 : vector<2x32xf32>
    %cst_59 = arith.constant 5.000000e-01 : f32
    %198 = vector.broadcast %cst_59 : f32 to vector<2x32xf32>
    %199 = arith.mulf %198, %197 : vector<2x32xf32>
    %200 = vector.extract_strided_slice %191 {offsets = [0, 32], sizes = [2, 32], strides = [1, 1]} : vector<2x128xf32> to vector<2x32xf32>
    %cst_60 = arith.constant 5.000000e-01 : f32
    %201 = vector.broadcast %cst_60 : f32 to vector<2x32xf32>
    %202 = arith.mulf %201, %200 : vector<2x32xf32>
    %203 = math.tanh %202 : vector<2x32xf32>
    %cst_61 = arith.constant 1.000000e+00 : f32
    %204 = vector.broadcast %cst_61 : f32 to vector<2x32xf32>
    %205 = arith.addf %203, %204 : vector<2x32xf32>
    %cst_62 = arith.constant 5.000000e-01 : f32
    %206 = vector.broadcast %cst_62 : f32 to vector<2x32xf32>
    %207 = arith.mulf %206, %205 : vector<2x32xf32>
    %208 = vector.extract_strided_slice %191 {offsets = [0, 64], sizes = [2, 32], strides = [1, 1]} : vector<2x128xf32> to vector<2x32xf32>
    %209 = vector.extract_strided_slice %191 {offsets = [0, 96], sizes = [2, 32], strides = [1, 1]} : vector<2x128xf32> to vector<2x32xf32>
    %210 = arith.mulf %199, %209 : vector<2x32xf32>
    %211 = arith.addf %208, %210 : vector<2x32xf32>
    %212 = math.tanh %211 : vector<2x32xf32>
    %cst_63 = arith.constant 1.000000e+00 : f32
    %213 = vector.broadcast %cst_63 : f32 to vector<2x32xf32>
    %214 = arith.subf %213, %207 : vector<2x32xf32>
    %215 = arith.mulf %214, %212 : vector<2x32xf32>
    %216 = arith.mulf %207, %187 : vector<2x32xf32>
    %217 = arith.addf %215, %216 : vector<2x32xf32>
    %218 = vector.extract_strided_slice %5 {offsets = [14, 0], sizes = [2, 128], strides = [1, 1]} : vector<32x128xf32> to vector<2x128xf32>
    %219 = arith.truncf %217 : vector<2x32xf32> to vector<2x32xbf16>
    %cst_64 = arith.constant dense<0.000000e+00> : vector<2x128xf32>
    %220 = tpu.matmul %219, %6, %cst_64 {dimension_numbers = #tpu.dot_dimension_numbers<[1], [0], [0], [1], [0, 0, 1, 1], [], []>} : vector<2x32xbf16>, vector<32x128xbf16>, vector<2x128xf32> -> vector<2x128xf32>
    %221 = arith.addf %218, %220 : vector<2x128xf32>
    %222 = vector.extract_strided_slice %221 {offsets = [0, 0], sizes = [2, 32], strides = [1, 1]} : vector<2x128xf32> to vector<2x32xf32>
    %cst_65 = arith.constant 5.000000e-01 : f32
    %223 = vector.broadcast %cst_65 : f32 to vector<2x32xf32>
    %224 = arith.mulf %223, %222 : vector<2x32xf32>
    %225 = math.tanh %224 : vector<2x32xf32>
    %cst_66 = arith.constant 1.000000e+00 : f32
    %226 = vector.broadcast %cst_66 : f32 to vector<2x32xf32>
    %227 = arith.addf %225, %226 : vector<2x32xf32>
    %cst_67 = arith.constant 5.000000e-01 : f32
    %228 = vector.broadcast %cst_67 : f32 to vector<2x32xf32>
    %229 = arith.mulf %228, %227 : vector<2x32xf32>
    %230 = vector.extract_strided_slice %221 {offsets = [0, 32], sizes = [2, 32], strides = [1, 1]} : vector<2x128xf32> to vector<2x32xf32>
    %cst_68 = arith.constant 5.000000e-01 : f32
    %231 = vector.broadcast %cst_68 : f32 to vector<2x32xf32>
    %232 = arith.mulf %231, %230 : vector<2x32xf32>
    %233 = math.tanh %232 : vector<2x32xf32>
    %cst_69 = arith.constant 1.000000e+00 : f32
    %234 = vector.broadcast %cst_69 : f32 to vector<2x32xf32>
    %235 = arith.addf %233, %234 : vector<2x32xf32>
    %cst_70 = arith.constant 5.000000e-01 : f32
    %236 = vector.broadcast %cst_70 : f32 to vector<2x32xf32>
    %237 = arith.mulf %236, %235 : vector<2x32xf32>
    %238 = vector.extract_strided_slice %221 {offsets = [0, 64], sizes = [2, 32], strides = [1, 1]} : vector<2x128xf32> to vector<2x32xf32>
    %239 = vector.extract_strided_slice %221 {offsets = [0, 96], sizes = [2, 32], strides = [1, 1]} : vector<2x128xf32> to vector<2x32xf32>
    %240 = arith.mulf %229, %239 : vector<2x32xf32>
    %241 = arith.addf %238, %240 : vector<2x32xf32>
    %242 = math.tanh %241 : vector<2x32xf32>
    %cst_71 = arith.constant 1.000000e+00 : f32
    %243 = vector.broadcast %cst_71 : f32 to vector<2x32xf32>
    %244 = arith.subf %243, %237 : vector<2x32xf32>
    %245 = arith.mulf %244, %242 : vector<2x32xf32>
    %246 = arith.mulf %237, %217 : vector<2x32xf32>
    %247 = arith.addf %245, %246 : vector<2x32xf32>
    %248 = vector.extract_strided_slice %5 {offsets = [16, 0], sizes = [2, 128], strides = [1, 1]} : vector<32x128xf32> to vector<2x128xf32>
    %249 = arith.truncf %247 : vector<2x32xf32> to vector<2x32xbf16>
    %cst_72 = arith.constant dense<0.000000e+00> : vector<2x128xf32>
    %250 = tpu.matmul %249, %6, %cst_72 {dimension_numbers = #tpu.dot_dimension_numbers<[1], [0], [0], [1], [0, 0, 1, 1], [], []>} : vector<2x32xbf16>, vector<32x128xbf16>, vector<2x128xf32> -> vector<2x128xf32>
    %251 = arith.addf %248, %250 : vector<2x128xf32>
    %252 = vector.extract_strided_slice %251 {offsets = [0, 0], sizes = [2, 32], strides = [1, 1]} : vector<2x128xf32> to vector<2x32xf32>
    %cst_73 = arith.constant 5.000000e-01 : f32
    %253 = vector.broadcast %cst_73 : f32 to vector<2x32xf32>
    %254 = arith.mulf %253, %252 : vector<2x32xf32>
    %255 = math.tanh %254 : vector<2x32xf32>
    %cst_74 = arith.constant 1.000000e+00 : f32
    %256 = vector.broadcast %cst_74 : f32 to vector<2x32xf32>
    %257 = arith.addf %255, %256 : vector<2x32xf32>
    %cst_75 = arith.constant 5.000000e-01 : f32
    %258 = vector.broadcast %cst_75 : f32 to vector<2x32xf32>
    %259 = arith.mulf %258, %257 : vector<2x32xf32>
    %260 = vector.extract_strided_slice %251 {offsets = [0, 32], sizes = [2, 32], strides = [1, 1]} : vector<2x128xf32> to vector<2x32xf32>
    %cst_76 = arith.constant 5.000000e-01 : f32
    %261 = vector.broadcast %cst_76 : f32 to vector<2x32xf32>
    %262 = arith.mulf %261, %260 : vector<2x32xf32>
    %263 = math.tanh %262 : vector<2x32xf32>
    %cst_77 = arith.constant 1.000000e+00 : f32
    %264 = vector.broadcast %cst_77 : f32 to vector<2x32xf32>
    %265 = arith.addf %263, %264 : vector<2x32xf32>
    %cst_78 = arith.constant 5.000000e-01 : f32
    %266 = vector.broadcast %cst_78 : f32 to vector<2x32xf32>
    %267 = arith.mulf %266, %265 : vector<2x32xf32>
    %268 = vector.extract_strided_slice %251 {offsets = [0, 64], sizes = [2, 32], strides = [1, 1]} : vector<2x128xf32> to vector<2x32xf32>
    %269 = vector.extract_strided_slice %251 {offsets = [0, 96], sizes = [2, 32], strides = [1, 1]} : vector<2x128xf32> to vector<2x32xf32>
    %270 = arith.mulf %259, %269 : vector<2x32xf32>
    %271 = arith.addf %268, %270 : vector<2x32xf32>
    %272 = math.tanh %271 : vector<2x32xf32>
    %cst_79 = arith.constant 1.000000e+00 : f32
    %273 = vector.broadcast %cst_79 : f32 to vector<2x32xf32>
    %274 = arith.subf %273, %267 : vector<2x32xf32>
    %275 = arith.mulf %274, %272 : vector<2x32xf32>
    %276 = arith.mulf %267, %247 : vector<2x32xf32>
    %277 = arith.addf %275, %276 : vector<2x32xf32>
    %278 = vector.extract_strided_slice %5 {offsets = [18, 0], sizes = [2, 128], strides = [1, 1]} : vector<32x128xf32> to vector<2x128xf32>
    %279 = arith.truncf %277 : vector<2x32xf32> to vector<2x32xbf16>
    %cst_80 = arith.constant dense<0.000000e+00> : vector<2x128xf32>
    %280 = tpu.matmul %279, %6, %cst_80 {dimension_numbers = #tpu.dot_dimension_numbers<[1], [0], [0], [1], [0, 0, 1, 1], [], []>} : vector<2x32xbf16>, vector<32x128xbf16>, vector<2x128xf32> -> vector<2x128xf32>
    %281 = arith.addf %278, %280 : vector<2x128xf32>
    %282 = vector.extract_strided_slice %281 {offsets = [0, 0], sizes = [2, 32], strides = [1, 1]} : vector<2x128xf32> to vector<2x32xf32>
    %cst_81 = arith.constant 5.000000e-01 : f32
    %283 = vector.broadcast %cst_81 : f32 to vector<2x32xf32>
    %284 = arith.mulf %283, %282 : vector<2x32xf32>
    %285 = math.tanh %284 : vector<2x32xf32>
    %cst_82 = arith.constant 1.000000e+00 : f32
    %286 = vector.broadcast %cst_82 : f32 to vector<2x32xf32>
    %287 = arith.addf %285, %286 : vector<2x32xf32>
    %cst_83 = arith.constant 5.000000e-01 : f32
    %288 = vector.broadcast %cst_83 : f32 to vector<2x32xf32>
    %289 = arith.mulf %288, %287 : vector<2x32xf32>
    %290 = vector.extract_strided_slice %281 {offsets = [0, 32], sizes = [2, 32], strides = [1, 1]} : vector<2x128xf32> to vector<2x32xf32>
    %cst_84 = arith.constant 5.000000e-01 : f32
    %291 = vector.broadcast %cst_84 : f32 to vector<2x32xf32>
    %292 = arith.mulf %291, %290 : vector<2x32xf32>
    %293 = math.tanh %292 : vector<2x32xf32>
    %cst_85 = arith.constant 1.000000e+00 : f32
    %294 = vector.broadcast %cst_85 : f32 to vector<2x32xf32>
    %295 = arith.addf %293, %294 : vector<2x32xf32>
    %cst_86 = arith.constant 5.000000e-01 : f32
    %296 = vector.broadcast %cst_86 : f32 to vector<2x32xf32>
    %297 = arith.mulf %296, %295 : vector<2x32xf32>
    %298 = vector.extract_strided_slice %281 {offsets = [0, 64], sizes = [2, 32], strides = [1, 1]} : vector<2x128xf32> to vector<2x32xf32>
    %299 = vector.extract_strided_slice %281 {offsets = [0, 96], sizes = [2, 32], strides = [1, 1]} : vector<2x128xf32> to vector<2x32xf32>
    %300 = arith.mulf %289, %299 : vector<2x32xf32>
    %301 = arith.addf %298, %300 : vector<2x32xf32>
    %302 = math.tanh %301 : vector<2x32xf32>
    %cst_87 = arith.constant 1.000000e+00 : f32
    %303 = vector.broadcast %cst_87 : f32 to vector<2x32xf32>
    %304 = arith.subf %303, %297 : vector<2x32xf32>
    %305 = arith.mulf %304, %302 : vector<2x32xf32>
    %306 = arith.mulf %297, %277 : vector<2x32xf32>
    %307 = arith.addf %305, %306 : vector<2x32xf32>
    %308 = vector.extract_strided_slice %5 {offsets = [20, 0], sizes = [2, 128], strides = [1, 1]} : vector<32x128xf32> to vector<2x128xf32>
    %309 = arith.truncf %307 : vector<2x32xf32> to vector<2x32xbf16>
    %cst_88 = arith.constant dense<0.000000e+00> : vector<2x128xf32>
    %310 = tpu.matmul %309, %6, %cst_88 {dimension_numbers = #tpu.dot_dimension_numbers<[1], [0], [0], [1], [0, 0, 1, 1], [], []>} : vector<2x32xbf16>, vector<32x128xbf16>, vector<2x128xf32> -> vector<2x128xf32>
    %311 = arith.addf %308, %310 : vector<2x128xf32>
    %312 = vector.extract_strided_slice %311 {offsets = [0, 0], sizes = [2, 32], strides = [1, 1]} : vector<2x128xf32> to vector<2x32xf32>
    %cst_89 = arith.constant 5.000000e-01 : f32
    %313 = vector.broadcast %cst_89 : f32 to vector<2x32xf32>
    %314 = arith.mulf %313, %312 : vector<2x32xf32>
    %315 = math.tanh %314 : vector<2x32xf32>
    %cst_90 = arith.constant 1.000000e+00 : f32
    %316 = vector.broadcast %cst_90 : f32 to vector<2x32xf32>
    %317 = arith.addf %315, %316 : vector<2x32xf32>
    %cst_91 = arith.constant 5.000000e-01 : f32
    %318 = vector.broadcast %cst_91 : f32 to vector<2x32xf32>
    %319 = arith.mulf %318, %317 : vector<2x32xf32>
    %320 = vector.extract_strided_slice %311 {offsets = [0, 32], sizes = [2, 32], strides = [1, 1]} : vector<2x128xf32> to vector<2x32xf32>
    %cst_92 = arith.constant 5.000000e-01 : f32
    %321 = vector.broadcast %cst_92 : f32 to vector<2x32xf32>
    %322 = arith.mulf %321, %320 : vector<2x32xf32>
    %323 = math.tanh %322 : vector<2x32xf32>
    %cst_93 = arith.constant 1.000000e+00 : f32
    %324 = vector.broadcast %cst_93 : f32 to vector<2x32xf32>
    %325 = arith.addf %323, %324 : vector<2x32xf32>
    %cst_94 = arith.constant 5.000000e-01 : f32
    %326 = vector.broadcast %cst_94 : f32 to vector<2x32xf32>
    %327 = arith.mulf %326, %325 : vector<2x32xf32>
    %328 = vector.extract_strided_slice %311 {offsets = [0, 64], sizes = [2, 32], strides = [1, 1]} : vector<2x128xf32> to vector<2x32xf32>
    %329 = vector.extract_strided_slice %311 {offsets = [0, 96], sizes = [2, 32], strides = [1, 1]} : vector<2x128xf32> to vector<2x32xf32>
    %330 = arith.mulf %319, %329 : vector<2x32xf32>
    %331 = arith.addf %328, %330 : vector<2x32xf32>
    %332 = math.tanh %331 : vector<2x32xf32>
    %cst_95 = arith.constant 1.000000e+00 : f32
    %333 = vector.broadcast %cst_95 : f32 to vector<2x32xf32>
    %334 = arith.subf %333, %327 : vector<2x32xf32>
    %335 = arith.mulf %334, %332 : vector<2x32xf32>
    %336 = arith.mulf %327, %307 : vector<2x32xf32>
    %337 = arith.addf %335, %336 : vector<2x32xf32>
    %338 = vector.extract_strided_slice %5 {offsets = [22, 0], sizes = [2, 128], strides = [1, 1]} : vector<32x128xf32> to vector<2x128xf32>
    %339 = arith.truncf %337 : vector<2x32xf32> to vector<2x32xbf16>
    %cst_96 = arith.constant dense<0.000000e+00> : vector<2x128xf32>
    %340 = tpu.matmul %339, %6, %cst_96 {dimension_numbers = #tpu.dot_dimension_numbers<[1], [0], [0], [1], [0, 0, 1, 1], [], []>} : vector<2x32xbf16>, vector<32x128xbf16>, vector<2x128xf32> -> vector<2x128xf32>
    %341 = arith.addf %338, %340 : vector<2x128xf32>
    %342 = vector.extract_strided_slice %341 {offsets = [0, 0], sizes = [2, 32], strides = [1, 1]} : vector<2x128xf32> to vector<2x32xf32>
    %cst_97 = arith.constant 5.000000e-01 : f32
    %343 = vector.broadcast %cst_97 : f32 to vector<2x32xf32>
    %344 = arith.mulf %343, %342 : vector<2x32xf32>
    %345 = math.tanh %344 : vector<2x32xf32>
    %cst_98 = arith.constant 1.000000e+00 : f32
    %346 = vector.broadcast %cst_98 : f32 to vector<2x32xf32>
    %347 = arith.addf %345, %346 : vector<2x32xf32>
    %cst_99 = arith.constant 5.000000e-01 : f32
    %348 = vector.broadcast %cst_99 : f32 to vector<2x32xf32>
    %349 = arith.mulf %348, %347 : vector<2x32xf32>
    %350 = vector.extract_strided_slice %341 {offsets = [0, 32], sizes = [2, 32], strides = [1, 1]} : vector<2x128xf32> to vector<2x32xf32>
    %cst_100 = arith.constant 5.000000e-01 : f32
    %351 = vector.broadcast %cst_100 : f32 to vector<2x32xf32>
    %352 = arith.mulf %351, %350 : vector<2x32xf32>
    %353 = math.tanh %352 : vector<2x32xf32>
    %cst_101 = arith.constant 1.000000e+00 : f32
    %354 = vector.broadcast %cst_101 : f32 to vector<2x32xf32>
    %355 = arith.addf %353, %354 : vector<2x32xf32>
    %cst_102 = arith.constant 5.000000e-01 : f32
    %356 = vector.broadcast %cst_102 : f32 to vector<2x32xf32>
    %357 = arith.mulf %356, %355 : vector<2x32xf32>
    %358 = vector.extract_strided_slice %341 {offsets = [0, 64], sizes = [2, 32], strides = [1, 1]} : vector<2x128xf32> to vector<2x32xf32>
    %359 = vector.extract_strided_slice %341 {offsets = [0, 96], sizes = [2, 32], strides = [1, 1]} : vector<2x128xf32> to vector<2x32xf32>
    %360 = arith.mulf %349, %359 : vector<2x32xf32>
    %361 = arith.addf %358, %360 : vector<2x32xf32>
    %362 = math.tanh %361 : vector<2x32xf32>
    %cst_103 = arith.constant 1.000000e+00 : f32
    %363 = vector.broadcast %cst_103 : f32 to vector<2x32xf32>
    %364 = arith.subf %363, %357 : vector<2x32xf32>
    %365 = arith.mulf %364, %362 : vector<2x32xf32>
    %366 = arith.mulf %357, %337 : vector<2x32xf32>
    %367 = arith.addf %365, %366 : vector<2x32xf32>
    %368 = vector.extract_strided_slice %5 {offsets = [24, 0], sizes = [2, 128], strides = [1, 1]} : vector<32x128xf32> to vector<2x128xf32>
    %369 = arith.truncf %367 : vector<2x32xf32> to vector<2x32xbf16>
    %cst_104 = arith.constant dense<0.000000e+00> : vector<2x128xf32>
    %370 = tpu.matmul %369, %6, %cst_104 {dimension_numbers = #tpu.dot_dimension_numbers<[1], [0], [0], [1], [0, 0, 1, 1], [], []>} : vector<2x32xbf16>, vector<32x128xbf16>, vector<2x128xf32> -> vector<2x128xf32>
    %371 = arith.addf %368, %370 : vector<2x128xf32>
    %372 = vector.extract_strided_slice %371 {offsets = [0, 0], sizes = [2, 32], strides = [1, 1]} : vector<2x128xf32> to vector<2x32xf32>
    %cst_105 = arith.constant 5.000000e-01 : f32
    %373 = vector.broadcast %cst_105 : f32 to vector<2x32xf32>
    %374 = arith.mulf %373, %372 : vector<2x32xf32>
    %375 = math.tanh %374 : vector<2x32xf32>
    %cst_106 = arith.constant 1.000000e+00 : f32
    %376 = vector.broadcast %cst_106 : f32 to vector<2x32xf32>
    %377 = arith.addf %375, %376 : vector<2x32xf32>
    %cst_107 = arith.constant 5.000000e-01 : f32
    %378 = vector.broadcast %cst_107 : f32 to vector<2x32xf32>
    %379 = arith.mulf %378, %377 : vector<2x32xf32>
    %380 = vector.extract_strided_slice %371 {offsets = [0, 32], sizes = [2, 32], strides = [1, 1]} : vector<2x128xf32> to vector<2x32xf32>
    %cst_108 = arith.constant 5.000000e-01 : f32
    %381 = vector.broadcast %cst_108 : f32 to vector<2x32xf32>
    %382 = arith.mulf %381, %380 : vector<2x32xf32>
    %383 = math.tanh %382 : vector<2x32xf32>
    %cst_109 = arith.constant 1.000000e+00 : f32
    %384 = vector.broadcast %cst_109 : f32 to vector<2x32xf32>
    %385 = arith.addf %383, %384 : vector<2x32xf32>
    %cst_110 = arith.constant 5.000000e-01 : f32
    %386 = vector.broadcast %cst_110 : f32 to vector<2x32xf32>
    %387 = arith.mulf %386, %385 : vector<2x32xf32>
    %388 = vector.extract_strided_slice %371 {offsets = [0, 64], sizes = [2, 32], strides = [1, 1]} : vector<2x128xf32> to vector<2x32xf32>
    %389 = vector.extract_strided_slice %371 {offsets = [0, 96], sizes = [2, 32], strides = [1, 1]} : vector<2x128xf32> to vector<2x32xf32>
    %390 = arith.mulf %379, %389 : vector<2x32xf32>
    %391 = arith.addf %388, %390 : vector<2x32xf32>
    %392 = math.tanh %391 : vector<2x32xf32>
    %cst_111 = arith.constant 1.000000e+00 : f32
    %393 = vector.broadcast %cst_111 : f32 to vector<2x32xf32>
    %394 = arith.subf %393, %387 : vector<2x32xf32>
    %395 = arith.mulf %394, %392 : vector<2x32xf32>
    %396 = arith.mulf %387, %367 : vector<2x32xf32>
    %397 = arith.addf %395, %396 : vector<2x32xf32>
    %398 = vector.extract_strided_slice %5 {offsets = [26, 0], sizes = [2, 128], strides = [1, 1]} : vector<32x128xf32> to vector<2x128xf32>
    %399 = arith.truncf %397 : vector<2x32xf32> to vector<2x32xbf16>
    %cst_112 = arith.constant dense<0.000000e+00> : vector<2x128xf32>
    %400 = tpu.matmul %399, %6, %cst_112 {dimension_numbers = #tpu.dot_dimension_numbers<[1], [0], [0], [1], [0, 0, 1, 1], [], []>} : vector<2x32xbf16>, vector<32x128xbf16>, vector<2x128xf32> -> vector<2x128xf32>
    %401 = arith.addf %398, %400 : vector<2x128xf32>
    %402 = vector.extract_strided_slice %401 {offsets = [0, 0], sizes = [2, 32], strides = [1, 1]} : vector<2x128xf32> to vector<2x32xf32>
    %cst_113 = arith.constant 5.000000e-01 : f32
    %403 = vector.broadcast %cst_113 : f32 to vector<2x32xf32>
    %404 = arith.mulf %403, %402 : vector<2x32xf32>
    %405 = math.tanh %404 : vector<2x32xf32>
    %cst_114 = arith.constant 1.000000e+00 : f32
    %406 = vector.broadcast %cst_114 : f32 to vector<2x32xf32>
    %407 = arith.addf %405, %406 : vector<2x32xf32>
    %cst_115 = arith.constant 5.000000e-01 : f32
    %408 = vector.broadcast %cst_115 : f32 to vector<2x32xf32>
    %409 = arith.mulf %408, %407 : vector<2x32xf32>
    %410 = vector.extract_strided_slice %401 {offsets = [0, 32], sizes = [2, 32], strides = [1, 1]} : vector<2x128xf32> to vector<2x32xf32>
    %cst_116 = arith.constant 5.000000e-01 : f32
    %411 = vector.broadcast %cst_116 : f32 to vector<2x32xf32>
    %412 = arith.mulf %411, %410 : vector<2x32xf32>
    %413 = math.tanh %412 : vector<2x32xf32>
    %cst_117 = arith.constant 1.000000e+00 : f32
    %414 = vector.broadcast %cst_117 : f32 to vector<2x32xf32>
    %415 = arith.addf %413, %414 : vector<2x32xf32>
    %cst_118 = arith.constant 5.000000e-01 : f32
    %416 = vector.broadcast %cst_118 : f32 to vector<2x32xf32>
    %417 = arith.mulf %416, %415 : vector<2x32xf32>
    %418 = vector.extract_strided_slice %401 {offsets = [0, 64], sizes = [2, 32], strides = [1, 1]} : vector<2x128xf32> to vector<2x32xf32>
    %419 = vector.extract_strided_slice %401 {offsets = [0, 96], sizes = [2, 32], strides = [1, 1]} : vector<2x128xf32> to vector<2x32xf32>
    %420 = arith.mulf %409, %419 : vector<2x32xf32>
    %421 = arith.addf %418, %420 : vector<2x32xf32>
    %422 = math.tanh %421 : vector<2x32xf32>
    %cst_119 = arith.constant 1.000000e+00 : f32
    %423 = vector.broadcast %cst_119 : f32 to vector<2x32xf32>
    %424 = arith.subf %423, %417 : vector<2x32xf32>
    %425 = arith.mulf %424, %422 : vector<2x32xf32>
    %426 = arith.mulf %417, %397 : vector<2x32xf32>
    %427 = arith.addf %425, %426 : vector<2x32xf32>
    %428 = vector.extract_strided_slice %5 {offsets = [28, 0], sizes = [2, 128], strides = [1, 1]} : vector<32x128xf32> to vector<2x128xf32>
    %429 = arith.truncf %427 : vector<2x32xf32> to vector<2x32xbf16>
    %cst_120 = arith.constant dense<0.000000e+00> : vector<2x128xf32>
    %430 = tpu.matmul %429, %6, %cst_120 {dimension_numbers = #tpu.dot_dimension_numbers<[1], [0], [0], [1], [0, 0, 1, 1], [], []>} : vector<2x32xbf16>, vector<32x128xbf16>, vector<2x128xf32> -> vector<2x128xf32>
    %431 = arith.addf %428, %430 : vector<2x128xf32>
    %432 = vector.extract_strided_slice %431 {offsets = [0, 0], sizes = [2, 32], strides = [1, 1]} : vector<2x128xf32> to vector<2x32xf32>
    %cst_121 = arith.constant 5.000000e-01 : f32
    %433 = vector.broadcast %cst_121 : f32 to vector<2x32xf32>
    %434 = arith.mulf %433, %432 : vector<2x32xf32>
    %435 = math.tanh %434 : vector<2x32xf32>
    %cst_122 = arith.constant 1.000000e+00 : f32
    %436 = vector.broadcast %cst_122 : f32 to vector<2x32xf32>
    %437 = arith.addf %435, %436 : vector<2x32xf32>
    %cst_123 = arith.constant 5.000000e-01 : f32
    %438 = vector.broadcast %cst_123 : f32 to vector<2x32xf32>
    %439 = arith.mulf %438, %437 : vector<2x32xf32>
    %440 = vector.extract_strided_slice %431 {offsets = [0, 32], sizes = [2, 32], strides = [1, 1]} : vector<2x128xf32> to vector<2x32xf32>
    %cst_124 = arith.constant 5.000000e-01 : f32
    %441 = vector.broadcast %cst_124 : f32 to vector<2x32xf32>
    %442 = arith.mulf %441, %440 : vector<2x32xf32>
    %443 = math.tanh %442 : vector<2x32xf32>
    %cst_125 = arith.constant 1.000000e+00 : f32
    %444 = vector.broadcast %cst_125 : f32 to vector<2x32xf32>
    %445 = arith.addf %443, %444 : vector<2x32xf32>
    %cst_126 = arith.constant 5.000000e-01 : f32
    %446 = vector.broadcast %cst_126 : f32 to vector<2x32xf32>
    %447 = arith.mulf %446, %445 : vector<2x32xf32>
    %448 = vector.extract_strided_slice %431 {offsets = [0, 64], sizes = [2, 32], strides = [1, 1]} : vector<2x128xf32> to vector<2x32xf32>
    %449 = vector.extract_strided_slice %431 {offsets = [0, 96], sizes = [2, 32], strides = [1, 1]} : vector<2x128xf32> to vector<2x32xf32>
    %450 = arith.mulf %439, %449 : vector<2x32xf32>
    %451 = arith.addf %448, %450 : vector<2x32xf32>
    %452 = math.tanh %451 : vector<2x32xf32>
    %cst_127 = arith.constant 1.000000e+00 : f32
    %453 = vector.broadcast %cst_127 : f32 to vector<2x32xf32>
    %454 = arith.subf %453, %447 : vector<2x32xf32>
    %455 = arith.mulf %454, %452 : vector<2x32xf32>
    %456 = arith.mulf %447, %427 : vector<2x32xf32>
    %457 = arith.addf %455, %456 : vector<2x32xf32>
    %458 = vector.extract_strided_slice %5 {offsets = [30, 0], sizes = [2, 128], strides = [1, 1]} : vector<32x128xf32> to vector<2x128xf32>
    %459 = arith.truncf %457 : vector<2x32xf32> to vector<2x32xbf16>
    %cst_128 = arith.constant dense<0.000000e+00> : vector<2x128xf32>
    %460 = tpu.matmul %459, %6, %cst_128 {dimension_numbers = #tpu.dot_dimension_numbers<[1], [0], [0], [1], [0, 0, 1, 1], [], []>} : vector<2x32xbf16>, vector<32x128xbf16>, vector<2x128xf32> -> vector<2x128xf32>
    %461 = arith.addf %458, %460 : vector<2x128xf32>
    %462 = vector.extract_strided_slice %461 {offsets = [0, 0], sizes = [2, 32], strides = [1, 1]} : vector<2x128xf32> to vector<2x32xf32>
    %cst_129 = arith.constant 5.000000e-01 : f32
    %463 = vector.broadcast %cst_129 : f32 to vector<2x32xf32>
    %464 = arith.mulf %463, %462 : vector<2x32xf32>
    %465 = math.tanh %464 : vector<2x32xf32>
    %cst_130 = arith.constant 1.000000e+00 : f32
    %466 = vector.broadcast %cst_130 : f32 to vector<2x32xf32>
    %467 = arith.addf %465, %466 : vector<2x32xf32>
    %cst_131 = arith.constant 5.000000e-01 : f32
    %468 = vector.broadcast %cst_131 : f32 to vector<2x32xf32>
    %469 = arith.mulf %468, %467 : vector<2x32xf32>
    %470 = vector.extract_strided_slice %461 {offsets = [0, 32], sizes = [2, 32], strides = [1, 1]} : vector<2x128xf32> to vector<2x32xf32>
    %cst_132 = arith.constant 5.000000e-01 : f32
    %471 = vector.broadcast %cst_132 : f32 to vector<2x32xf32>
    %472 = arith.mulf %471, %470 : vector<2x32xf32>
    %473 = math.tanh %472 : vector<2x32xf32>
    %cst_133 = arith.constant 1.000000e+00 : f32
    %474 = vector.broadcast %cst_133 : f32 to vector<2x32xf32>
    %475 = arith.addf %473, %474 : vector<2x32xf32>
    %cst_134 = arith.constant 5.000000e-01 : f32
    %476 = vector.broadcast %cst_134 : f32 to vector<2x32xf32>
    %477 = arith.mulf %476, %475 : vector<2x32xf32>
    %478 = vector.extract_strided_slice %461 {offsets = [0, 64], sizes = [2, 32], strides = [1, 1]} : vector<2x128xf32> to vector<2x32xf32>
    %479 = vector.extract_strided_slice %461 {offsets = [0, 96], sizes = [2, 32], strides = [1, 1]} : vector<2x128xf32> to vector<2x32xf32>
    %480 = arith.mulf %469, %479 : vector<2x32xf32>
    %481 = arith.addf %478, %480 : vector<2x32xf32>
    %482 = math.tanh %481 : vector<2x32xf32>
    %cst_135 = arith.constant 1.000000e+00 : f32
    %483 = vector.broadcast %cst_135 : f32 to vector<2x32xf32>
    %484 = arith.subf %483, %477 : vector<2x32xf32>
    %485 = arith.mulf %484, %482 : vector<2x32xf32>
    %486 = arith.mulf %477, %457 : vector<2x32xf32>
    %487 = arith.addf %485, %486 : vector<2x32xf32>
    %488 = arith.truncf %487 : vector<2x32xf32> to vector<2x32xbf16>
    %c0_136 = arith.constant 0 : index
    %c0_137 = arith.constant 0 : index
    %489 = vector.load %arg5[%c0_136, %c0_137] : memref<32x8xbf16, #tpu.memory_space<vmem>>, vector<32x8xbf16>
    %cst_138 = arith.constant dense<0.000000e+00> : vector<2x8xf32>
    %490 = tpu.matmul %488, %489, %cst_138 {dimension_numbers = #tpu.dot_dimension_numbers<[1], [0], [0], [1], [0, 0, 1, 1], [], []>} : vector<2x32xbf16>, vector<32x8xbf16>, vector<2x8xf32> -> vector<2x8xf32>
    %c0_139 = arith.constant 0 : index
    %c0_140 = arith.constant 0 : index
    %491 = vector.load %arg6[%c0_139, %c0_140] : memref<1x8xf32, #tpu.memory_space<vmem>>, vector<1x8xf32>
    %492 = vector.broadcast %491 : vector<1x8xf32> to vector<2x8xf32>
    %493 = arith.addf %490, %492 : vector<2x8xf32>
    %cst_141 = arith.constant dense<0xFF800000> : vector<2xf32>
    %494 = vector.multi_reduction <maximumf>, %493, %cst_141 [1] : vector<2x8xf32> to vector<2xf32>
    %495 = vector.shape_cast %494 : vector<2xf32> to vector<2x1xf32>
    %496 = vector.broadcast %495 : vector<2x1xf32> to vector<2x8xf32>
    %497 = arith.subf %493, %496 : vector<2x8xf32>
    %498 = math.exp %497 : vector<2x8xf32>
    %cst_142 = arith.constant dense<0.000000e+00> : vector<2xf32>
    %499 = vector.multi_reduction <add>, %498, %cst_142 [1] : vector<2x8xf32> to vector<2xf32>
    %500 = vector.shape_cast %499 : vector<2xf32> to vector<2x1xf32>
    %501 = math.log %500 : vector<2x1xf32>
    %502 = vector.broadcast %501 : vector<2x1xf32> to vector<2x8xf32>
    %503 = arith.subf %497, %502 : vector<2x8xf32>
    %c0_143 = arith.constant 0 : index
    %c0_144 = arith.constant 0 : index
    %504 = vector.load %arg7[%c0_143, %c0_144] : memref<2x8xf32, #tpu.memory_space<vmem>>, vector<2x8xf32>
    tpu.vector_store %arg7[%c0_143, %c0_144], %503 {strides = array<i32>} : memref<2x8xf32, #tpu.memory_space<vmem>>, vector<2x8xf32>,
    return
  }
  func.func @transform_0(%arg0: i32) -> (i32, i32) {
    %c0_i32 = arith.constant 0 : i32
    %c0_i32_0 = arith.constant 0 : i32
    %c0_i32_1 = arith.constant 0 : i32
    return %c0_i32, %c0_i32_0 : i32, i32
  }
  func.func @transform_1(%arg0: i32) -> (i32, i32) {
    %c0_i32 = arith.constant 0 : i32
    %c0_i32_0 = arith.constant 0 : i32
    %c0_i32_1 = arith.constant 0 : i32
    return %c0_i32, %c0_i32_0 : i32, i32
  }
  func.func @transform_2(%arg0: i32) -> (i32, i32) {
    %c0_i32 = arith.constant 0 : i32
    %c0_i32_0 = arith.constant 0 : i32
    %c0_i32_1 = arith.constant 0 : i32
    return %c0_i32, %c0_i32_0 : i32, i32
  }
  func.func @transform_3(%arg0: i32) -> (i32, i32) {
    %c0_i32 = arith.constant 0 : i32
    %c0_i32_0 = arith.constant 0 : i32
    %c0_i32_1 = arith.constant 0 : i32
    return %c0_i32, %c0_i32_0 : i32, i32
  }
  func.func @transform_4(%arg0: i32) -> (i32, i32) {
    %c0_i32 = arith.constant 0 : i32
    %c0_i32_0 = arith.constant 0 : i32
    %c0_i32_1 = arith.constant 0 : i32
    return %c0_i32, %c0_i32_0 : i32, i32
  }
  func.func @transform_5(%arg0: i32) -> (i32, i32) {
    %c0_i32 = arith.constant 0 : i32
    %c0_i32_0 = arith.constant 0 : i32
    %c0_i32_1 = arith.constant 0 : i32
    return %c0_i32, %c0_i32_0 : i32, i32
  }
  func.func @transform_6(%arg0: i32) -> (i32, i32) {
    %c0_i32 = arith.constant 0 : i32
    %c0_i32_0 = arith.constant 0 : i32
    %c0_i32_1 = arith.constant 0 : i32
    return %c0_i32, %c0_i32_0 : i32, i32
  }
}

</mosaic_0001>

<llo_original>
// kernel: tpu_custom_call.1
$region0: #{tpu_custom_call.1}
  #allocation0 [shape = 'u32[]', space=smem, size = 0x4, offset = 0x4, fixed_abs, tag = 'smem constant byte address 0x4 - core index']
  #allocation1 [shape = 'u32[144,128]{1,0:T(1,128)}', space=vmem, size = 0x12000, scoped, tag = 'internal scratch']
  %s0 = inlined_call_operand.vmem [shape: bf16[32,8], index: 0, kind: input, shape index: {}]
  %s1 = inlined_call_operand.vmem [shape: bf16[8,128], index: 1, kind: input, shape index: {}]
  %s2 = inlined_call_operand.vmem [shape: bf16[32,128], index: 2, kind: input, shape index: {}]
  %s3 = inlined_call_operand.vmem [shape: f32[1,128], index: 3, kind: input, shape index: {}]
  %s4 = inlined_call_operand.vmem [shape: bf16[32,8], index: 4, kind: input, shape index: {}]
  %s5 = inlined_call_operand.vmem [shape: f32[1,8], index: 5, kind: input, shape index: {}]
  %s6 = inlined_call_operand.hbm [shape: f32[2,8], index: 6, kind: output, shape index: {}]
  %s7 = sld [smem:[#allocation0]]
  $region34: #{tpu_custom_call.1} parent=0
    _
  %s9 = ssub.s32 1, %s7
  %s10 = scalar_select 0, %s9, %s7
  $region1: #{tpu_custom_call.1} parent=0
    #allocation2 [shape = 'u8[1024]{0}', space=vmem, size = 0x400, scoped, tag = 'output window, operand 0, single buffered']
    #allocation3 [shape = 's32[1]{0}', space=sflag, size = 0x4, scoped, tag = 'scoped memory for tpu_custom_call.1']
    %11 = vsyncpa [#allocation3], 0
    // Predicated region
    $region2: #{tpu_custom_call.1} parent=1 // pred_check
      _
    $region3: #{tpu_custom_call.1} parent=1 // pred_check_branch
      %13 = sbr.rel (0) target = $region5
    $region4: #{tpu_custom_call.1} parent=1 // pred_region
      _
    $region5: #{tpu_custom_call.1} parent=1 // pred_fallthru
      _
    // Predicated region
    $region6: #{tpu_custom_call.1} parent=1 // pred_check
      _
    $region7: #{tpu_custom_call.1} parent=1 // pred_check_branch
      %15 = sbr.rel (0) target = $region9
    $region8: #{tpu_custom_call.1} parent=1 // pred_region
      _
    $region9: #{tpu_custom_call.1} parent=1 // pred_fallthru
      _
    // Predicated region
    $region10: #{tpu_custom_call.1} parent=1 // pred_check
      _
    $region11: #{tpu_custom_call.1} parent=1 // pred_check_branch
      %17 = sbr.rel (0) target = $region13
    $region12: #{tpu_custom_call.1} parent=1 // pred_region
      _
    $region13: #{tpu_custom_call.1} parent=1 // pred_fallthru
      _
    // Predicated region
    $region14: #{tpu_custom_call.1} parent=1 // pred_check
      _
    $region15: #{tpu_custom_call.1} parent=1 // pred_check_branch
      %19 = sbr.rel (0) target = $region17
    $region16: #{tpu_custom_call.1} parent=1 // pred_region
      _
    $region17: #{tpu_custom_call.1} parent=1 // pred_fallthru
      _
    // Predicated region
    $region18: #{tpu_custom_call.1} parent=1 // pred_check
      _
    $region19: #{tpu_custom_call.1} parent=1 // pred_check_branch
      %21 = sbr.rel (0) target = $region21
    $region20: #{tpu_custom_call.1} parent=1 // pred_region
      _
    $region21: #{tpu_custom_call.1} parent=1 // pred_fallthru
      _
    // Predicated region
    $region22: #{tpu_custom_call.1} parent=1 // pred_check
      _
    $region23: #{tpu_custom_call.1} parent=1 // pred_check_branch
      %23 = sbr.rel (0) target = $region25
    $region24: #{tpu_custom_call.1} parent=1 // pred_region
      _
    $region25: #{tpu_custom_call.1} parent=1 // pred_fallthru
      _
    %v25 = vld [vmem:[%s0] sm:$0xf]
    %v26 = vld [vmem:[%s0 + $0x4] sm:$0xf]
    %v27 = vld [vmem:[%s0 + $0x8] sm:$0xf]
    %v28 = vld [vmem:[%s0 + $0xc] sm:$0xf]
    %v29 = vld [vmem:[%s1] sm:$0xf]
    %v30 = vld [vmem:[%s3] sm:$0x1]
    %v32 = vlaneseq
    %v33 = vshrl.u32 %v32, 7
    %v34 = vsub.s32 0, %v33
    %v35 = vrot.slane %v30, %v34
    %v41 = vunpack.c.l.b16 %v25
    %v42 = vunpack.c.l.b16 %v26
    %v43 = vunpack.c.l.b16 %v27
    %v44 = vunpack.c.l.b16 %v28
    %v45 = vpack.c.b16 %v42, %v41
    %v46 = vpack.c.b16 %v44, %v43
    %vm47 = vcmask 64512
    %v49 = vsel %vm47, %v45, 0
    %v52 = vsel %vm47, %v46, 0
    %vm54 = vcmask 1043456
    %v56 = vsel %vm54, %v29, 0
    %58 = vmatprep.subr.bf16.mxu0 0
    %59 = vmatpush1.bf16.msra.mxu0 %v56
    %60 = vmatprep.subr.bf16.mxu0 0
    %61 = vmatpush1.bf16.msra.mxu0 0
    %62 = vmatprep.subr.bf16.mxu0 0
    %63 = vmatpush1.bf16.msra.mxu0 0
    %64 = vmatprep.subr.bf16.mxu0 0
    %65 = vmatpush1.bf16.msra.mxu0 0
    %66 = vmatprep.subr.bf16.mxu0 0
    %67 = vmatpush1.bf16.msra.mxu0 0
    %68 = vmatprep.subr.bf16.mxu0 0
    %69 = vmatpush1.bf16.msra.mxu0 0
    %70 = vmatprep.subr.bf16.mxu0 0
    %71 = vmatpush1.bf16.msra.mxu0 0
    %72 = vmatprep.subr.bf16.mxu0 0
    %73 = vmatpush1.bf16.msra.mxu0 0
    %74 = vmatprep.subr.bf16.mxu0 0
    %75 = vmatpush1.bf16.msra.mxu0 0
    %76 = vmatprep.subr.bf16.mxu0 0
    %77 = vmatpush1.bf16.msra.mxu0 0
    %78 = vmatprep.subr.bf16.mxu0 0
    %79 = vmatpush1.bf16.msra.mxu0 0
    %80 = vmatprep.subr.bf16.mxu0 0
    %81 = vmatpush1.bf16.msra.mxu0 0
    %82 = vmatprep.subr.bf16.mxu0 0
    %83 = vmatpush1.bf16.msra.mxu0 0
    %84 = vmatprep.subr.bf16.mxu0 0
    %85 = vmatpush1.bf16.msra.mxu0 0
    %86 = vmatprep.subr.bf16.mxu0 0
    %87 = vmatpush1.bf16.msra.mxu0 0
    %88 = vmatprep.subr.bf16.mxu0 0
    %89 = vmatpush1.bf16.msra.mxu0 0
    %90 = vmatprep.mubr.bf16.mxu0 0
    %91 = vmatmul.mubr.bf16.gmra.mrb[0].mxu0 %v49
    %v92 = vpop.f32.mrb[0].mxu0
    %v93 = vadd.f32 %v35, %v92
    %v94 = vpop.f32.mrb[0].mxu0
    %v95 = vpop.f32.mrb[0].mxu0
    %v96 = vadd.f32 %v35, %v95
    %v97 = vpop.f32.mrb[0].mxu0
    %98 = vmatprep.mubr.bf16.mxu0 0
    %99 = vmatmul.mubr.bf16.gmra.mrb[0].mxu0 %v52
    %v100 = vpop.f32.mrb[0].mxu0
    %v101 = vadd.f32 %v35, %v100
    %v102 = vpop.f32.mrb[0].mxu0
    %v103 = vpop.f32.mrb[0].mxu0
    %v104 = vadd.f32 %v35, %v103
    %v105 = vpop.f32.mrb[0].mxu0
    %106 = vdwg.mxu0
    %v107 = vld [vmem:[%s2] sm:$0xf]
    %v108 = vld [vmem:[%s2 + $0x4] sm:$0xf]
    %v109 = vld [vmem:[%s2 + $0x8] sm:$0xf]
    %v110 = vld [vmem:[%s2 + $0xc] sm:$0xf]
    %v115 = vunpack.c.l.b16 %v107
    %v116 = vunpack.c.l.b16 %v108
    %v117 = vunpack.c.l.b16 %v109
    %v118 = vunpack.c.l.b16 %v110
    %v119 = vpack.c.b16 %v116, %v115
    %v120 = vpack.c.b16 %v118, %v117
    %vm123 = vcmask 261120
    %v125 = vsel %vm123, 0, 0
    %127 = vmatprep.subr.bf16.mxu0 0
    %128 = vmatpush1.bf16.msra.mxu0 %v119
    %129 = vmatprep.subr.bf16.mxu0 0
    %130 = vmatpush1.bf16.msra.mxu0 %v120
    %131 = vmatprep.subr.bf16.mxu0 0
    %132 = vmatpush1.bf16.msra.mxu0 0
    %133 = vmatprep.subr.bf16.mxu0 0
    %134 = vmatpush1.bf16.msra.mxu0 0
    %135 = vmatprep.subr.bf16.mxu0 0
    %136 = vmatpush1.bf16.msra.mxu0 0
    %137 = vmatprep.subr.bf16.mxu0 0
    %138 = vmatpush1.bf16.msra.mxu0 0
    %139 = vmatprep.subr.bf16.mxu0 0
    %140 = vmatpush1.bf16.msra.mxu0 0
    %141 = vmatprep.subr.bf16.mxu0 0
    %142 = vmatpush1.bf16.msra.mxu0 0
    %143 = vmatprep.subr.bf16.mxu0 0
    %144 = vmatpush1.bf16.msra.mxu0 0
    %145 = vmatprep.subr.bf16.mxu0 0
    %146 = vmatpush1.bf16.msra.mxu0 0
    %147 = vmatprep.subr.bf16.mxu0 0
    %148 = vmatpush1.bf16.msra.mxu0 0
    %149 = vmatprep.subr.bf16.mxu0 0
    %150 = vmatpush1.bf16.msra.mxu0 0
    %151 = vmatprep.subr.bf16.mxu0 0
    %152 = vmatpush1.bf16.msra.mxu0 0
    %153 = vmatprep.subr.bf16.mxu0 0
    %154 = vmatpush1.bf16.msra.mxu0 0
    %155 = vmatprep.subr.bf16.mxu0 0
    %156 = vmatpush1.bf16.msra.mxu0 0
    %157 = vmatprep.subr.bf16.mxu0 0
    %158 = vmatpush1.bf16.msra.mxu0 0
    %159 = vmatprep.mubr.bf16.mxu0 0
    %160 = vmatmul.mubr.bf16.gmra.mrb[0].mxu0 %v125
    %v161 = vpop.f32.mrb[0].mxu0
    %v162 = vadd.f32 0.0, %v161
    %v163 = vpop.f32.mrb[0].mxu0
    %v164 = vpop.f32.mrb[0].mxu0
    %v165 = vpop.f32.mrb[0].mxu0
    %166 = vdwg.mxu0
    %v167 = vadd.f32 %v93, %v162
    %v168 = vmul.f32 %v167, 0.5
    %v169 = vtanh.pop %v168
    %v170 = vadd.f32 %v169, 1.0
    %v171 = vmul.f32 %v170, 0.5
    %173 = vrot.lane.b32.xlu0 %v167, 32
    %v174 = vpop.permute.xlu0 %173
    %v176 = vmul.f32 %v171, %v174
    %178 = vrot.lane.b32.xlu0 %v176, 64
    %v179 = vpop.permute.xlu0 %178
    %v181 = vadd.f32 %v167, %v179
    %v182 = vtanh.pop %v181
    %v183 = vsub.f32 1.0, %v171
    %185 = vrot.lane.b32.xlu0 %v182, 96
    %v186 = vpop.permute.xlu0 %185
    %v188 = vmul.f32 %v183, %v186
    %v189 = vmul.f32 %v171, 0.0
    %v190 = vadd.f32 %v188, %v189
    %v191 = vpack.c.bf16 %v190, %v190
    %193 = vrot.lane.b32.xlu0 %v191, 96
    %v194 = vpop.permute.xlu0 %193
    %v196 = vsel %vm123, %v194, 0
    %198 = vmatprep.subr.bf16.mxu0 0
    %199 = vmatpush1.bf16.msra.mxu0 %v119
    %200 = vmatprep.subr.bf16.mxu0 0
    %201 = vmatpush1.bf16.msra.mxu0 %v120
    %202 = vmatprep.subr.bf16.mxu0 0
    %203 = vmatpush1.bf16.msra.mxu0 0
    %204 = vmatprep.subr.bf16.mxu0 0
    %205 = vmatpush1.bf16.msra.mxu0 0
    %206 = vmatprep.subr.bf16.mxu0 0
    %207 = vmatpush1.bf16.msra.mxu0 0
    %208 = vmatprep.subr.bf16.mxu0 0
    %209 = vmatpush1.bf16.msra.mxu0 0
    %210 = vmatprep.subr.bf16.mxu0 0
    %211 = vmatpush1.bf16.msra.mxu0 0
    %212 = vmatprep.subr.bf16.mxu0 0
    %213 = vmatpush1.bf16.msra.mxu0 0
    %214 = vmatprep.subr.bf16.mxu0 0
    %215 = vmatpush1.bf16.msra.mxu0 0
    %216 = vmatprep.subr.bf16.mxu0 0
    %217 = vmatpush1.bf16.msra.mxu0 0
    %218 = vmatprep.subr.bf16.mxu0 0
    %219 = vmatpush1.bf16.msra.mxu0 0
    %220 = vmatprep.subr.bf16.mxu0 0
    %221 = vmatpush1.bf16.msra.mxu0 0
    %222 = vmatprep.subr.bf16.mxu0 0
    %223 = vmatpush1.bf16.msra.mxu0 0
    %224 = vmatprep.subr.bf16.mxu0 0
    %225 = vmatpush1.bf16.msra.mxu0 0
    %226 = vmatprep.subr.bf16.mxu0 0
    %227 = vmatpush1.bf16.msra.mxu0 0
    %228 = vmatprep.subr.bf16.mxu0 0
    %229 = vmatpush1.bf16.msra.mxu0 0
    %230 = vmatprep.mubr.bf16.mxu0 0
    %231 = vmatmul.mubr.bf16.gmra.mrb[0].mxu0 %v196
    %v232 = vpop.f32.mrb[0].mxu0
    %v233 = vadd.f32 0.0, %v232
    %v234 = vpop.f32.mrb[0].mxu0
    %v235 = vpop.f32.mrb[0].mxu0
    %v236 = vpop.f32.mrb[0].mxu0
    %237 = vdwg.mxu0
    %v239 = vrot.slane %v233, 6
    %v241 = vadd.f32 %v93, %v239
    %v242 = vmul.f32 %v241, 0.5
    %v243 = vtanh.pop %v242
    %v244 = vadd.f32 %v243, 1.0
    %v245 = vmul.f32 %v244, 0.5
    %247 = vrot.lane.b32.xlu0 %v241, 32
    %v248 = vpop.permute.xlu0 %247
    %v250 = vmul.f32 %v245, %v248
    %252 = vrot.lane.b32.xlu0 %v250, 64
    %v253 = vpop.permute.xlu0 %252
    %v255 = vadd.f32 %v241, %v253
    %v256 = vtanh.pop %v255
    %v257 = vsub.f32 1.0, %v245
    %259 = vrot.lane.b32.xlu0 %v256, 96
    %v260 = vpop.permute.xlu0 %259
    %v262 = vmul.f32 %v257, %v260
    %v264 = vrot.slane %v190, 6
    %v266 = vmul.f32 %v245, %v264
    %v267 = vadd.f32 %v262, %v266
    %v268 = vpack.c.bf16 %v267, %v267
    %v270 = vrot.slane %v268, 1
    %271 = vrot.lane.b32.xlu0 %v270, 96
    %v272 = vpop.permute.xlu0 %271
    %v274 = vsel %vm123, %v272, 0
    %276 = vmatprep.subr.bf16.mxu0 0
    %277 = vmatpush1.bf16.msra.mxu0 %v119
    %278 = vmatprep.subr.bf16.mxu0 0
    %279 = vmatpush1.bf16.msra.mxu0 %v120
    %280 = vmatprep.subr.bf16.mxu0 0
    %281 = vmatpush1.bf16.msra.mxu0 0
    %282 = vmatprep.subr.bf16.mxu0 0
    %283 = vmatpush1.bf16.msra.mxu0 0
    %284 = vmatprep.subr.bf16.mxu0 0
    %285 = vmatpush1.bf16.msra.mxu0 0
    %286 = vmatprep.subr.bf16.mxu0 0
    %287 = vmatpush1.bf16.msra.mxu0 0
    %288 = vmatprep.subr.bf16.mxu0 0
    %289 = vmatpush1.bf16.msra.mxu0 0
    %290 = vmatprep.subr.bf16.mxu0 0
    %291 = vmatpush1.bf16.msra.mxu0 0
    %292 = vmatprep.subr.bf16.mxu0 0
    %293 = vmatpush1.bf16.msra.mxu0 0
    %294 = vmatprep.subr.bf16.mxu0 0
    %295 = vmatpush1.bf16.msra.mxu0 0
    %296 = vmatprep.subr.bf16.mxu0 0
    %297 = vmatpush1.bf16.msra.mxu0 0
    %298 = vmatprep.subr.bf16.mxu0 0
    %299 = vmatpush1.bf16.msra.mxu0 0
    %300 = vmatprep.subr.bf16.mxu0 0
    %301 = vmatpush1.bf16.msra.mxu0 0
    %302 = vmatprep.subr.bf16.mxu0 0
    %303 = vmatpush1.bf16.msra.mxu0 0
    %304 = vmatprep.subr.bf16.mxu0 0
    %305 = vmatpush1.bf16.msra.mxu0 0
    %306 = vmatprep.subr.bf16.mxu0 0
    %307 = vmatpush1.bf16.msra.mxu0 0
    %308 = vmatprep.mubr.bf16.mxu0 0
    %309 = vmatmul.mubr.bf16.gmra.mrb[0].mxu0 %v274
    %v310 = vpop.f32.mrb[0].mxu0
    %v311 = vadd.f32 0.0, %v310
    %v312 = vpop.f32.mrb[0].mxu0
    %v313 = vpop.f32.mrb[0].mxu0
    %v314 = vpop.f32.mrb[0].mxu0
    %315 = vdwg.mxu0
    %v317 = vrot.slane %v311, 4
    %v319 = vadd.f32 %v93, %v317
    %v320 = vmul.f32 %v319, 0.5
    %v321 = vtanh.pop %v320
    %v322 = vadd.f32 %v321, 1.0
    %v323 = vmul.f32 %v322, 0.5
    %325 = vrot.lane.b32.xlu0 %v319, 32
    %v326 = vpop.permute.xlu0 %325
    %v328 = vmul.f32 %v323, %v326
    %330 = vrot.lane.b32.xlu0 %v328, 64
    %v331 = vpop.permute.xlu0 %330
    %v333 = vadd.f32 %v319, %v331
    %v334 = vtanh.pop %v333
    %v335 = vsub.f32 1.0, %v323
    %337 = vrot.lane.b32.xlu0 %v334, 96
    %v338 = vpop.permute.xlu0 %337
    %v340 = vmul.f32 %v335, %v338
    %v342 = vrot.slane %v267, 6
    %v344 = vmul.f32 %v323, %v342
    %v345 = vadd.f32 %v340, %v344
    %v346 = vpack.c.bf16 %v345, %v345
    %v348 = vrot.slane %v346, 2
    %349 = vrot.lane.b32.xlu0 %v348, 96
    %v350 = vpop.permute.xlu0 %349
    %v352 = vsel %vm123, %v350, 0
    %354 = vmatprep.subr.bf16.mxu0 0
    %355 = vmatpush1.bf16.msra.mxu0 %v119
    %356 = vmatprep.subr.bf16.mxu0 0
    %357 = vmatpush1.bf16.msra.mxu0 %v120
    %358 = vmatprep.subr.bf16.mxu0 0
    %359 = vmatpush1.bf16.msra.mxu0 0
    %360 = vmatprep.subr.bf16.mxu0 0
    %361 = vmatpush1.bf16.msra.mxu0 0
    %362 = vmatprep.subr.bf16.mxu0 0
    %363 = vmatpush1.bf16.msra.mxu0 0
    %364 = vmatprep.subr.bf16.mxu0 0
    %365 = vmatpush1.bf16.msra.mxu0 0
    %366 = vmatprep.subr.bf16.mxu0 0
    %367 = vmatpush1.bf16.msra.mxu0 0
    %368 = vmatprep.subr.bf16.mxu0 0
    %369 = vmatpush1.bf16.msra.mxu0 0
    %370 = vmatprep.subr.bf16.mxu0 0
    %371 = vmatpush1.bf16.msra.mxu0 0
    %372 = vmatprep.subr.bf16.mxu0 0
    %373 = vmatpush1.bf16.msra.mxu0 0
    %374 = vmatprep.subr.bf16.mxu0 0
    %375 = vmatpush1.bf16.msra.mxu0 0
    %376 = vmatprep.subr.bf16.mxu0 0
    %377 = vmatpush1.bf16.msra.mxu0 0
    %378 = vmatprep.subr.bf16.mxu0 0
    %379 = vmatpush1.bf16.msra.mxu0 0
    %380 = vmatprep.subr.bf16.mxu0 0
    %381 = vmatpush1.bf16.msra.mxu0 0
    %382 = vmatprep.subr.bf16.mxu0 0
    %383 = vmatpush1.bf16.msra.mxu0 0
    %384 = vmatprep.subr.bf16.mxu0 0
    %385 = vmatpush1.bf16.msra.mxu0 0
    %386 = vmatprep.mubr.bf16.mxu0 0
    %387 = vmatmul.mubr.bf16.gmra.mrb[0].mxu0 %v352
    %v388 = vpop.f32.mrb[0].mxu0
    %v389 = vadd.f32 0.0, %v388
    %v390 = vpop.f32.mrb[0].mxu0
    %v391 = vpop.f32.mrb[0].mxu0
    %v392 = vpop.f32.mrb[0].mxu0
    %393 = vdwg.mxu0
    %v395 = vrot.slane %v389, 2
    %v397 = vadd.f32 %v93, %v395
    %v398 = vmul.f32 %v397, 0.5
    %v399 = vtanh.pop %v398
    %v400 = vadd.f32 %v399, 1.0
    %v401 = vmul.f32 %v400, 0.5
    %403 = vrot.lane.b32.xlu0 %v397, 32
    %v404 = vpop.permute.xlu0 %403
    %v406 = vmul.f32 %v401, %v404
    %408 = vrot.lane.b32.xlu0 %v406, 64
    %v409 = vpop.permute.xlu0 %408
    %v411 = vadd.f32 %v397, %v409
    %v412 = vtanh.pop %v411
    %v413 = vsub.f32 1.0, %v401
    %415 = vrot.lane.b32.xlu0 %v412, 96
    %v416 = vpop.permute.xlu0 %415
    %v418 = vmul.f32 %v413, %v416
    %v420 = vrot.slane %v345, 6
    %v422 = vmul.f32 %v401, %v420
    %v423 = vadd.f32 %v418, %v422
    %v424 = vpack.c.bf16 %v423, %v423
    %v426 = vrot.slane %v424, 3
    %427 = vrot.lane.b32.xlu0 %v426, 96
    %v428 = vpop.permute.xlu0 %427
    %v430 = vsel %vm123, %v428, 0
    %432 = vmatprep.subr.bf16.mxu0 0
    %433 = vmatpush1.bf16.msra.mxu0 %v119
    %434 = vmatprep.subr.bf16.mxu0 0
    %435 = vmatpush1.bf16.msra.mxu0 %v120
    %436 = vmatprep.subr.bf16.mxu0 0
    %437 = vmatpush1.bf16.msra.mxu0 0
    %438 = vmatprep.subr.bf16.mxu0 0
    %439 = vmatpush1.bf16.msra.mxu0 0
    %440 = vmatprep.subr.bf16.mxu0 0
    %441 = vmatpush1.bf16.msra.mxu0 0
    %442 = vmatprep.subr.bf16.mxu0 0
    %443 = vmatpush1.bf16.msra.mxu0 0
    %444 = vmatprep.subr.bf16.mxu0 0
    %445 = vmatpush1.bf16.msra.mxu0 0
    %446 = vmatprep.subr.bf16.mxu0 0
    %447 = vmatpush1.bf16.msra.mxu0 0
    %448 = vmatprep.subr.bf16.mxu0 0
    %449 = vmatpush1.bf16.msra.mxu0 0
    %450 = vmatprep.subr.bf16.mxu0 0
    %451 = vmatpush1.bf16.msra.mxu0 0
    %452 = vmatprep.subr.bf16.mxu0 0
    %453 = vmatpush1.bf16.msra.mxu0 0
    %454 = vmatprep.subr.bf16.mxu0 0
    %455 = vmatpush1.bf16.msra.mxu0 0
    %456 = vmatprep.subr.bf16.mxu0 0
    %457 = vmatpush1.bf16.msra.mxu0 0
    %458 = vmatprep.subr.bf16.mxu0 0
    %459 = vmatpush1.bf16.msra.mxu0 0
    %460 = vmatprep.subr.bf16.mxu0 0
    %461 = vmatpush1.bf16.msra.mxu0 0
    %462 = vmatprep.subr.bf16.mxu0 0
    %463 = vmatpush1.bf16.msra.mxu0 0
    %464 = vmatprep.mubr.bf16.mxu0 0
    %465 = vmatmul.mubr.bf16.gmra.mrb[0].mxu0 %v430
    %v466 = vpop.f32.mrb[0].mxu0
    %v467 = vadd.f32 0.0, %v466
    %v468 = vpop.f32.mrb[0].mxu0
    %v469 = vpop.f32.mrb[0].mxu0
    %v470 = vpop.f32.mrb[0].mxu0
    %471 = vdwg.mxu0
    %v472 = vadd.f32 %v96, %v467
    %v473 = vmul.f32 %v472, 0.5
    %v474 = vtanh.pop %v473
    %v475 = vadd.f32 %v474, 1.0
    %v476 = vmul.f32 %v475, 0.5
    %478 = vrot.lane.b32.xlu0 %v472, 32
    %v479 = vpop.permute.xlu0 %478
    %v481 = vmul.f32 %v476, %v479
    %483 = vrot.lane.b32.xlu0 %v481, 64
    %v484 = vpop.permute.xlu0 %483
    %v486 = vadd.f32 %v472, %v484
    %v487 = vtanh.pop %v486
    %v488 = vsub.f32 1.0, %v476
    %490 = vrot.lane.b32.xlu0 %v487, 96
    %v491 = vpop.permute.xlu0 %490
    %v493 = vmul.f32 %v488, %v491
    %v495 = vrot.slane %v423, 6
    %v497 = vmul.f32 %v476, %v495
    %v498 = vadd.f32 %v493, %v497
    %v499 = vpack.c.bf16 %v498, %v498
    %501 = vrot.lane.b32.xlu0 %v499, 96
    %v502 = vpop.permute.xlu0 %501
    %v504 = vsel %vm123, %v502, 0
    %506 = vmatprep.subr.bf16.mxu0 0
    %507 = vmatpush1.bf16.msra.mxu0 %v119
    %508 = vmatprep.subr.bf16.mxu0 0
    %509 = vmatpush1.bf16.msra.mxu0 %v120
    %510 = vmatprep.subr.bf16.mxu0 0
    %511 = vmatpush1.bf16.msra.mxu0 0
    %512 = vmatprep.subr.bf16.mxu0 0
    %513 = vmatpush1.bf16.msra.mxu0 0
    %514 = vmatprep.subr.bf16.mxu0 0
    %515 = vmatpush1.bf16.msra.mxu0 0
    %516 = vmatprep.subr.bf16.mxu0 0
    %517 = vmatpush1.bf16.msra.mxu0 0
    %518 = vmatprep.subr.bf16.mxu0 0
    %519 = vmatpush1.bf16.msra.mxu0 0
    %520 = vmatprep.subr.bf16.mxu0 0
    %521 = vmatpush1.bf16.msra.mxu0 0
    %522 = vmatprep.subr.bf16.mxu0 0
    %523 = vmatpush1.bf16.msra.mxu0 0
    %524 = vmatprep.subr.bf16.mxu0 0
    %525 = vmatpush1.bf16.msra.mxu0 0
    %526 = vmatprep.subr.bf16.mxu0 0
    %527 = vmatpush1.bf16.msra.mxu0 0
    %528 = vmatprep.subr.bf16.mxu0 0
    %529 = vmatpush1.bf16.msra.mxu0 0
    %530 = vmatprep.subr.bf16.mxu0 0
    %531 = vmatpush1.bf16.msra.mxu0 0
    %532 = vmatprep.subr.bf16.mxu0 0
    %533 = vmatpush1.bf16.msra.mxu0 0
    %534 = vmatprep.subr.bf16.mxu0 0
    %535 = vmatpush1.bf16.msra.mxu0 0
    %536 = vmatprep.subr.bf16.mxu0 0
    %537 = vmatpush1.bf16.msra.mxu0 0
    %538 = vmatprep.mubr.bf16.mxu0 0
    %539 = vmatmul.mubr.bf16.gmra.mrb[0].mxu0 %v504
    %v540 = vpop.f32.mrb[0].mxu0
    %v541 = vadd.f32 0.0, %v540
    %v542 = vpop.f32.mrb[0].mxu0
    %v543 = vpop.f32.mrb[0].mxu0
    %v544 = vpop.f32.mrb[0].mxu0
    %545 = vdwg.mxu0
    %v547 = vrot.slane %v541, 6
    %v549 = vadd.f32 %v96, %v547
    %v550 = vmul.f32 %v549, 0.5
    %v551 = vtanh.pop %v550
    %v552 = vadd.f32 %v551, 1.0
    %v553 = vmul.f32 %v552, 0.5
    %555 = vrot.lane.b32.xlu0 %v549, 32
    %v556 = vpop.permute.xlu0 %555
    %v558 = vmul.f32 %v553, %v556
    %560 = vrot.lane.b32.xlu0 %v558, 64
    %v561 = vpop.permute.xlu0 %560
    %v563 = vadd.f32 %v549, %v561
    %v564 = vtanh.pop %v563
    %v565 = vsub.f32 1.0, %v553
    %567 = vrot.lane.b32.xlu0 %v564, 96
    %v568 = vpop.permute.xlu0 %567
    %v570 = vmul.f32 %v565, %v568
    %v572 = vrot.slane %v498, 6
    %v574 = vmul.f32 %v553, %v572
    %v575 = vadd.f32 %v570, %v574
    %v576 = vpack.c.bf16 %v575, %v575
    %v578 = vrot.slane %v576, 1
    %579 = vrot.lane.b32.xlu0 %v578, 96
    %v580 = vpop.permute.xlu0 %579
    %v582 = vsel %vm123, %v580, 0
    %584 = vmatprep.subr.bf16.mxu0 0
    %585 = vmatpush1.bf16.msra.mxu0 %v119
    %586 = vmatprep.subr.bf16.mxu0 0
    %587 = vmatpush1.bf16.msra.mxu0 %v120
    %588 = vmatprep.subr.bf16.mxu0 0
    %589 = vmatpush1.bf16.msra.mxu0 0
    %590 = vmatprep.subr.bf16.mxu0 0
    %591 = vmatpush1.bf16.msra.mxu0 0
    %592 = vmatprep.subr.bf16.mxu0 0
    %593 = vmatpush1.bf16.msra.mxu0 0
    %594 = vmatprep.subr.bf16.mxu0 0
    %595 = vmatpush1.bf16.msra.mxu0 0
    %596 = vmatprep.subr.bf16.mxu0 0
    %597 = vmatpush1.bf16.msra.mxu0 0
    %598 = vmatprep.subr.bf16.mxu0 0
    %599 = vmatpush1.bf16.msra.mxu0 0
    %600 = vmatprep.subr.bf16.mxu0 0
    %601 = vmatpush1.bf16.msra.mxu0 0
    %602 = vmatprep.subr.bf16.mxu0 0
    %603 = vmatpush1.bf16.msra.mxu0 0
    %604 = vmatprep.subr.bf16.mxu0 0
    %605 = vmatpush1.bf16.msra.mxu0 0
    %606 = vmatprep.subr.bf16.mxu0 0
    %607 = vmatpush1.bf16.msra.mxu0 0
    %608 = vmatprep.subr.bf16.mxu0 0
    %609 = vmatpush1.bf16.msra.mxu0 0
    %610 = vmatprep.subr.bf16.mxu0 0
    %611 = vmatpush1.bf16.msra.mxu0 0
    %612 = vmatprep.subr.bf16.mxu0 0
    %613 = vmatpush1.bf16.msra.mxu0 0
    %614 = vmatprep.subr.bf16.mxu0 0
    %615 = vmatpush1.bf16.msra.mxu0 0
    %616 = vmatprep.mubr.bf16.mxu0 0
    %617 = vmatmul.mubr.bf16.gmra.mrb[0].mxu0 %v582
    %v618 = vpop.f32.mrb[0].mxu0
    %v619 = vadd.f32 0.0, %v618
    %v620 = vpop.f32.mrb[0].mxu0
    %v621 = vpop.f32.mrb[0].mxu0
    %v622 = vpop.f32.mrb[0].mxu0
    %623 = vdwg.mxu0
    %v625 = vrot.slane %v619, 4
    %v627 = vadd.f32 %v96, %v625
    %v628 = vmul.f32 %v627, 0.5
    %v629 = vtanh.pop %v628
    %v630 = vadd.f32 %v629, 1.0
    %v631 = vmul.f32 %v630, 0.5
    %633 = vrot.lane.b32.xlu0 %v627, 32
    %v634 = vpop.permute.xlu0 %633
    %v636 = vmul.f32 %v631, %v634
    %638 = vrot.lane.b32.xlu0 %v636, 64
    %v639 = vpop.permute.xlu0 %638
    %v641 = vadd.f32 %v627, %v639
    %v642 = vtanh.pop %v641
    %v643 = vsub.f32 1.0, %v631
    %645 = vrot.lane.b32.xlu0 %v642, 96
    %v646 = vpop.permute.xlu0 %645
    %v648 = vmul.f32 %v643, %v646
    %v650 = vrot.slane %v575, 6
    %v652 = vmul.f32 %v631, %v650
    %v653 = vadd.f32 %v648, %v652
    %v654 = vpack.c.bf16 %v653, %v653
    %v656 = vrot.slane %v654, 2
    %657 = vrot.lane.b32.xlu0 %v656, 96
    %v658 = vpop.permute.xlu0 %657
    %v660 = vsel %vm123, %v658, 0
    %662 = vmatprep.subr.bf16.mxu0 0
    %663 = vmatpush1.bf16.msra.mxu0 %v119
    %664 = vmatprep.subr.bf16.mxu0 0
    %665 = vmatpush1.bf16.msra.mxu0 %v120
    %666 = vmatprep.subr.bf16.mxu0 0
    %667 = vmatpush1.bf16.msra.mxu0 0
    %668 = vmatprep.subr.bf16.mxu0 0
    %669 = vmatpush1.bf16.msra.mxu0 0
    %670 = vmatprep.subr.bf16.mxu0 0
    %671 = vmatpush1.bf16.msra.mxu0 0
    %672 = vmatprep.subr.bf16.mxu0 0
    %673 = vmatpush1.bf16.msra.mxu0 0
    %674 = vmatprep.subr.bf16.mxu0 0
    %675 = vmatpush1.bf16.msra.mxu0 0
    %676 = vmatprep.subr.bf16.mxu0 0
    %677 = vmatpush1.bf16.msra.mxu0 0
    %678 = vmatprep.subr.bf16.mxu0 0
    %679 = vmatpush1.bf16.msra.mxu0 0
    %680 = vmatprep.subr.bf16.mxu0 0
    %681 = vmatpush1.bf16.msra.mxu0 0
    %682 = vmatprep.subr.bf16.mxu0 0
    %683 = vmatpush1.bf16.msra.mxu0 0
    %684 = vmatprep.subr.bf16.mxu0 0
    %685 = vmatpush1.bf16.msra.mxu0 0
    %686 = vmatprep.subr.bf16.mxu0 0
    %687 = vmatpush1.bf16.msra.mxu0 0
    %688 = vmatprep.subr.bf16.mxu0 0
    %689 = vmatpush1.bf16.msra.mxu0 0
    %690 = vmatprep.subr.bf16.mxu0 0
    %691 = vmatpush1.bf16.msra.mxu0 0
    %692 = vmatprep.subr.bf16.mxu0 0
    %693 = vmatpush1.bf16.msra.mxu0 0
    %694 = vmatprep.mubr.bf16.mxu0 0
    %695 = vmatmul.mubr.bf16.gmra.mrb[0].mxu0 %v660
    %v696 = vpop.f32.mrb[0].mxu0
    %v697 = vadd.f32 0.0, %v696
    %v698 = vpop.f32.mrb[0].mxu0
    %v699 = vpop.f32.mrb[0].mxu0
    %v700 = vpop.f32.mrb[0].mxu0
    %701 = vdwg.mxu0
    %v703 = vrot.slane %v697, 2
    %v705 = vadd.f32 %v96, %v703
    %v706 = vmul.f32 %v705, 0.5
    %v707 = vtanh.pop %v706
    %v708 = vadd.f32 %v707, 1.0
    %v709 = vmul.f32 %v708, 0.5
    %711 = vrot.lane.b32.xlu0 %v705, 32
    %v712 = vpop.permute.xlu0 %711
    %v714 = vmul.f32 %v709, %v712
    %716 = vrot.lane.b32.xlu0 %v714, 64
    %v717 = vpop.permute.xlu0 %716
    %v719 = vadd.f32 %v705, %v717
    %v720 = vtanh.pop %v719
    %v721 = vsub.f32 1.0, %v709
    %723 = vrot.lane.b32.xlu0 %v720, 96
    %v724 = vpop.permute.xlu0 %723
    %v726 = vmul.f32 %v721, %v724
    %v728 = vrot.slane %v653, 6
    %v730 = vmul.f32 %v709, %v728
    %v731 = vadd.f32 %v726, %v730
    %v732 = vpack.c.bf16 %v731, %v731
    %v734 = vrot.slane %v732, 3
    %735 = vrot.lane.b32.xlu0 %v734, 96
    %v736 = vpop.permute.xlu0 %735
    %v738 = vsel %vm123, %v736, 0
    %740 = vmatprep.subr.bf16.mxu0 0
    %741 = vmatpush1.bf16.msra.mxu0 %v119
    %742 = vmatprep.subr.bf16.mxu0 0
    %743 = vmatpush1.bf16.msra.mxu0 %v120
    %744 = vmatprep.subr.bf16.mxu0 0
    %745 = vmatpush1.bf16.msra.mxu0 0
    %746 = vmatprep.subr.bf16.mxu0 0
    %747 = vmatpush1.bf16.msra.mxu0 0
    %748 = vmatprep.subr.bf16.mxu0 0
    %749 = vmatpush1.bf16.msra.mxu0 0
    %750 = vmatprep.subr.bf16.mxu0 0
    %751 = vmatpush1.bf16.msra.mxu0 0
    %752 = vmatprep.subr.bf16.mxu0 0
    %753 = vmatpush1.bf16.msra.mxu0 0
    %754 = vmatprep.subr.bf16.mxu0 0
    %755 = vmatpush1.bf16.msra.mxu0 0
    %756 = vmatprep.subr.bf16.mxu0 0
    %757 = vmatpush1.bf16.msra.mxu0 0
    %758 = vmatprep.subr.bf16.mxu0 0
    %759 = vmatpush1.bf16.msra.mxu0 0
    %760 = vmatprep.subr.bf16.mxu0 0
    %761 = vmatpush1.bf16.msra.mxu0 0
    %762 = vmatprep.subr.bf16.mxu0 0
    %763 = vmatpush1.bf16.msra.mxu0 0
    %764 = vmatprep.subr.bf16.mxu0 0
    %765 = vmatpush1.bf16.msra.mxu0 0
    %766 = vmatprep.subr.bf16.mxu0 0
    %767 = vmatpush1.bf16.msra.mxu0 0
    %768 = vmatprep.subr.bf16.mxu0 0
    %769 = vmatpush1.bf16.msra.mxu0 0
    %770 = vmatprep.subr.bf16.mxu0 0
    %771 = vmatpush1.bf16.msra.mxu0 0
    %772 = vmatprep.mubr.bf16.mxu0 0
    %773 = vmatmul.mubr.bf16.gmra.mrb[0].mxu0 %v738
    %v774 = vpop.f32.mrb[0].mxu0
    %v775 = vadd.f32 0.0, %v774
    %v776 = vpop.f32.mrb[0].mxu0
    %v777 = vpop.f32.mrb[0].mxu0
    %v778 = vpop.f32.mrb[0].mxu0
    %779 = vdwg.mxu0
    %v780 = vadd.f32 %v101, %v775
    %v781 = vmul.f32 %v780, 0.5
    %v782 = vtanh.pop %v781
    %v783 = vadd.f32 %v782, 1.0
    %v784 = vmul.f32 %v783, 0.5
    %786 = vrot.lane.b32.xlu0 %v780, 32
    %v787 = vpop.permute.xlu0 %786
    %v789 = vmul.f32 %v784, %v787
    %791 = vrot.lane.b32.xlu0 %v789, 64
    %v792 = vpop.permute.xlu0 %791
    %v794 = vadd.f32 %v780, %v792
    %v795 = vtanh.pop %v794
    %v796 = vsub.f32 1.0, %v784
    %798 = vrot.lane.b32.xlu0 %v795, 96
    %v799 = vpop.permute.xlu0 %798
    %v801 = vmul.f32 %v796, %v799
    %v803 = vrot.slane %v731, 6
    %v805 = vmul.f32 %v784, %v803
    %v806 = vadd.f32 %v801, %v805
    %v807 = vpack.c.bf16 %v806, %v806
    %809 = vrot.lane.b32.xlu0 %v807, 96
    %v810 = vpop.permute.xlu0 %809
    %v812 = vsel %vm123, %v810, 0
    %814 = vmatprep.subr.bf16.mxu0 0
    %815 = vmatpush1.bf16.msra.mxu0 %v119
    %816 = vmatprep.subr.bf16.mxu0 0
    %817 = vmatpush1.bf16.msra.mxu0 %v120
    %818 = vmatprep.subr.bf16.mxu0 0
    %819 = vmatpush1.bf16.msra.mxu0 0
    %820 = vmatprep.subr.bf16.mxu0 0
    %821 = vmatpush1.bf16.msra.mxu0 0
    %822 = vmatprep.subr.bf16.mxu0 0
    %823 = vmatpush1.bf16.msra.mxu0 0
    %824 = vmatprep.subr.bf16.mxu0 0
    %825 = vmatpush1.bf16.msra.mxu0 0
    %826 = vmatprep.subr.bf16.mxu0 0
    %827 = vmatpush1.bf16.msra.mxu0 0
    %828 = vmatprep.subr.bf16.mxu0 0
    %829 = vmatpush1.bf16.msra.mxu0 0
    %830 = vmatprep.subr.bf16.mxu0 0
    %831 = vmatpush1.bf16.msra.mxu0 0
    %832 = vmatprep.subr.bf16.mxu0 0
    %833 = vmatpush1.bf16.msra.mxu0 0
    %834 = vmatprep.subr.bf16.mxu0 0
    %835 = vmatpush1.bf16.msra.mxu0 0
    %836 = vmatprep.subr.bf16.mxu0 0
    %837 = vmatpush1.bf16.msra.mxu0 0
    %838 = vmatprep.subr.bf16.mxu0 0
    %839 = vmatpush1.bf16.msra.mxu0 0
    %840 = vmatprep.subr.bf16.mxu0 0
    %841 = vmatpush1.bf16.msra.mxu0 0
    %842 = vmatprep.subr.bf16.mxu0 0
    %843 = vmatpush1.bf16.msra.mxu0 0
    %844 = vmatprep.subr.bf16.mxu0 0
    %845 = vmatpush1.bf16.msra.mxu0 0
    %846 = vmatprep.mubr.bf16.mxu0 0
    %847 = vmatmul.mubr.bf16.gmra.mrb[0].mxu0 %v812
    %v848 = vpop.f32.mrb[0].mxu0
    %v849 = vadd.f32 0.0, %v848
    %v850 = vpop.f32.mrb[0].mxu0
    %v851 = vpop.f32.mrb[0].mxu0
    %v852 = vpop.f32.mrb[0].mxu0
    %853 = vdwg.mxu0
    %v855 = vrot.slane %v849, 6
    %v857 = vadd.f32 %v101, %v855
    %v858 = vmul.f32 %v857, 0.5
    %v859 = vtanh.pop %v858
    %v860 = vadd.f32 %v859, 1.0
    %v861 = vmul.f32 %v860, 0.5
    %863 = vrot.lane.b32.xlu0 %v857, 32
    %v864 = vpop.permute.xlu0 %863
    %v866 = vmul.f32 %v861, %v864
    %868 = vrot.lane.b32.xlu0 %v866, 64
    %v869 = vpop.permute.xlu0 %868
    %v871 = vadd.f32 %v857, %v869
    %v872 = vtanh.pop %v871
    %v873 = vsub.f32 1.0, %v861
    %875 = vrot.lane.b32.xlu0 %v872, 96
    %v876 = vpop.permute.xlu0 %875
    %v878 = vmul.f32 %v873, %v876
    %v880 = vrot.slane %v806, 6
    %v882 = vmul.f32 %v861, %v880
    %v883 = vadd.f32 %v878, %v882
    %v884 = vpack.c.bf16 %v883, %v883
    %v886 = vrot.slane %v884, 1
    %887 = vrot.lane.b32.xlu0 %v886, 96
    %v888 = vpop.permute.xlu0 %887
    %v890 = vsel %vm123, %v888, 0
    %892 = vmatprep.subr.bf16.mxu0 0
    %893 = vmatpush1.bf16.msra.mxu0 %v119
    %894 = vmatprep.subr.bf16.mxu0 0
    %895 = vmatpush1.bf16.msra.mxu0 %v120
    %896 = vmatprep.subr.bf16.mxu0 0
    %897 = vmatpush1.bf16.msra.mxu0 0
    %898 = vmatprep.subr.bf16.mxu0 0
    %899 = vmatpush1.bf16.msra.mxu0 0
    %900 = vmatprep.subr.bf16.mxu0 0
    %901 = vmatpush1.bf16.msra.mxu0 0
    %902 = vmatprep.subr.bf16.mxu0 0
    %903 = vmatpush1.bf16.msra.mxu0 0
    %904 = vmatprep.subr.bf16.mxu0 0
    %905 = vmatpush1.bf16.msra.mxu0 0
    %906 = vmatprep.subr.bf16.mxu0 0
    %907 = vmatpush1.bf16.msra.mxu0 0
    %908 = vmatprep.subr.bf16.mxu0 0
    %909 = vmatpush1.bf16.msra.mxu0 0
    %910 = vmatprep.subr.bf16.mxu0 0
    %911 = vmatpush1.bf16.msra.mxu0 0
    %912 = vmatprep.subr.bf16.mxu0 0
    %913 = vmatpush1.bf16.msra.mxu0 0
    %914 = vmatprep.subr.bf16.mxu0 0
    %915 = vmatpush1.bf16.msra.mxu0 0
    %916 = vmatprep.subr.bf16.mxu0 0
    %917 = vmatpush1.bf16.msra.mxu0 0
    %918 = vmatprep.subr.bf16.mxu0 0
    %919 = vmatpush1.bf16.msra.mxu0 0
    %920 = vmatprep.subr.bf16.mxu0 0
    %921 = vmatpush1.bf16.msra.mxu0 0
    %922 = vmatprep.subr.bf16.mxu0 0
    %923 = vmatpush1.bf16.msra.mxu0 0
    %924 = vmatprep.mubr.bf16.mxu0 0
    %925 = vmatmul.mubr.bf16.gmra.mrb[0].mxu0 %v890
    %v926 = vpop.f32.mrb[0].mxu0
    %v927 = vadd.f32 0.0, %v926
    %v928 = vpop.f32.mrb[0].mxu0
    %v929 = vpop.f32.mrb[0].mxu0
    %v930 = vpop.f32.mrb[0].mxu0
    %931 = vdwg.mxu0
    %v933 = vrot.slane %v927, 4
    %v935 = vadd.f32 %v101, %v933
    %v936 = vmul.f32 %v935, 0.5
    %v937 = vtanh.pop %v936
    %v938 = vadd.f32 %v937, 1.0
    %v939 = vmul.f32 %v938, 0.5
    %941 = vrot.lane.b32.xlu0 %v935, 32
    %v942 = vpop.permute.xlu0 %941
    %v944 = vmul.f32 %v939, %v942
    %946 = vrot.lane.b32.xlu0 %v944, 64
    %v947 = vpop.permute.xlu0 %946
    %v949 = vadd.f32 %v935, %v947
    %v950 = vtanh.pop %v949
    %v951 = vsub.f32 1.0, %v939
    %953 = vrot.lane.b32.xlu0 %v950, 96
    %v954 = vpop.permute.xlu0 %953
    %v956 = vmul.f32 %v951, %v954
    %v958 = vrot.slane %v883, 6
    %v960 = vmul.f32 %v939, %v958
    %v961 = vadd.f32 %v956, %v960
    %v962 = vpack.c.bf16 %v961, %v961
    %v964 = vrot.slane %v962, 2
    %965 = vrot.lane.b32.xlu0 %v964, 96
    %v966 = vpop.permute.xlu0 %965
    %v968 = vsel %vm123, %v966, 0
    %970 = vmatprep.subr.bf16.mxu0 0
    %971 = vmatpush1.bf16.msra.mxu0 %v119
    %972 = vmatprep.subr.bf16.mxu0 0
    %973 = vmatpush1.bf16.msra.mxu0 %v120
    %974 = vmatprep.subr.bf16.mxu0 0
    %975 = vmatpush1.bf16.msra.mxu0 0
    %976 = vmatprep.subr.bf16.mxu0 0
    %977 = vmatpush1.bf16.msra.mxu0 0
    %978 = vmatprep.subr.bf16.mxu0 0
    %979 = vmatpush1.bf16.msra.mxu0 0
    %980 = vmatprep.subr.bf16.mxu0 0
    %981 = vmatpush1.bf16.msra.mxu0 0
    %982 = vmatprep.subr.bf16.mxu0 0
    %983 = vmatpush1.bf16.msra.mxu0 0
    %984 = vmatprep.subr.bf16.mxu0 0
    %985 = vmatpush1.bf16.msra.mxu0 0
    %986 = vmatprep.subr.bf16.mxu0 0
    %987 = vmatpush1.bf16.msra.mxu0 0
    %988 = vmatprep.subr.bf16.mxu0 0
    %989 = vmatpush1.bf16.msra.mxu0 0
    %990 = vmatprep.subr.bf16.mxu0 0
    %991 = vmatpush1.bf16.msra.mxu0 0
    %992 = vmatprep.subr.bf16.mxu0 0
    %993 = vmatpush1.bf16.msra.mxu0 0
    %994 = vmatprep.subr.bf16.mxu0 0
    %995 = vmatpush1.bf16.msra.mxu0 0
    %996 = vmatprep.subr.bf16.mxu0 0
    %997 = vmatpush1.bf16.msra.mxu0 0
    %998 = vmatprep.subr.bf16.mxu0 0
    %999 = vmatpush1.bf16.msra.mxu0 0
    %1000 = vmatprep.subr.bf16.mxu0 0
    %1001 = vmatpush1.bf16.msra.mxu0 0
    %1002 = vmatprep.mubr.bf16.mxu0 0
    %1003 = vmatmul.mubr.bf16.gmra.mrb[0].mxu0 %v968
    %v1004 = vpop.f32.mrb[0].mxu0
    %v1005 = vadd.f32 0.0, %v1004
    %v1006 = vpop.f32.mrb[0].mxu0
    %v1007 = vpop.f32.mrb[0].mxu0
    %v1008 = vpop.f32.mrb[0].mxu0
    %1009 = vdwg.mxu0
    %v1011 = vrot.slane %v1005, 2
    %v1013 = vadd.f32 %v101, %v1011
    %v1014 = vmul.f32 %v1013, 0.5
    %v1015 = vtanh.pop %v1014
    %v1016 = vadd.f32 %v1015, 1.0
    %v1017 = vmul.f32 %v1016, 0.5
    %1019 = vrot.lane.b32.xlu0 %v1013, 32
    %v1020 = vpop.permute.xlu0 %1019
    %v1022 = vmul.f32 %v1017, %v1020
    %1024 = vrot.lane.b32.xlu0 %v1022, 64
    %v1025 = vpop.permute.xlu0 %1024
    %v1027 = vadd.f32 %v1013, %v1025
    %v1028 = vtanh.pop %v1027
    %v1029 = vsub.f32 1.0, %v1017
    %1031 = vrot.lane.b32.xlu0 %v1028, 96
    %v1032 = vpop.permute.xlu0 %1031
    %v1034 = vmul.f32 %v1029, %v1032
    %v1036 = vrot.slane %v961, 6
    %v1038 = vmul.f32 %v1017, %v1036
    %v1039 = vadd.f32 %v1034, %v1038
    %v1040 = vpack.c.bf16 %v1039, %v1039
    %v1042 = vrot.slane %v1040, 3
    %1043 = vrot.lane.b32.xlu0 %v1042, 96
    %v1044 = vpop.permute.xlu0 %1043
    %v1046 = vsel %vm123, %v1044, 0
    %1048 = vmatprep.subr.bf16.mxu0 0
    %1049 = vmatpush1.bf16.msra.mxu0 %v119
    %1050 = vmatprep.subr.bf16.mxu0 0
    %1051 = vmatpush1.bf16.msra.mxu0 %v120
    %1052 = vmatprep.subr.bf16.mxu0 0
    %1053 = vmatpush1.bf16.msra.mxu0 0
    %1054 = vmatprep.subr.bf16.mxu0 0
    %1055 = vmatpush1.bf16.msra.mxu0 0
    %1056 = vmatprep.subr.bf16.mxu0 0
    %1057 = vmatpush1.bf16.msra.mxu0 0
    %1058 = vmatprep.subr.bf16.mxu0 0
    %1059 = vmatpush1.bf16.msra.mxu0 0
    %1060 = vmatprep.subr.bf16.mxu0 0
    %1061 = vmatpush1.bf16.msra.mxu0 0
    %1062 = vmatprep.subr.bf16.mxu0 0
    %1063 = vmatpush1.bf16.msra.mxu0 0
    %1064 = vmatprep.subr.bf16.mxu0 0
    %1065 = vmatpush1.bf16.msra.mxu0 0
    %1066 = vmatprep.subr.bf16.mxu0 0
    %1067 = vmatpush1.bf16.msra.mxu0 0
    %1068 = vmatprep.subr.bf16.mxu0 0
    %1069 = vmatpush1.bf16.msra.mxu0 0
    %1070 = vmatprep.subr.bf16.mxu0 0
    %1071 = vmatpush1.bf16.msra.mxu0 0
    %1072 = vmatprep.subr.bf16.mxu0 0
    %1073 = vmatpush1.bf16.msra.mxu0 0
    %1074 = vmatprep.subr.bf16.mxu0 0
    %1075 = vmatpush1.bf16.msra.mxu0 0
    %1076 = vmatprep.subr.bf16.mxu0 0
    %1077 = vmatpush1.bf16.msra.mxu0 0
    %1078 = vmatprep.subr.bf16.mxu0 0
    %1079 = vmatpush1.bf16.msra.mxu0 0
    %1080 = vmatprep.mubr.bf16.mxu0 0
    %1081 = vmatmul.mubr.bf16.gmra.mrb[0].mxu0 %v1046
    %v1082 = vpop.f32.mrb[0].mxu0
    %v1083 = vadd.f32 0.0, %v1082
    %v1084 = vpop.f32.mrb[0].mxu0
    %v1085 = vpop.f32.mrb[0].mxu0
    %v1086 = vpop.f32.mrb[0].mxu0
    %1087 = vdwg.mxu0
    %v1088 = vadd.f32 %v104, %v1083
    %v1089 = vmul.f32 %v1088, 0.5
    %v1090 = vtanh.pop %v1089
    %v1091 = vadd.f32 %v1090, 1.0
    %v1092 = vmul.f32 %v1091, 0.5
    %1094 = vrot.lane.b32.xlu0 %v1088, 32
    %v1095 = vpop.permute.xlu0 %1094
    %v1097 = vmul.f32 %v1092, %v1095
    %1099 = vrot.lane.b32.xlu0 %v1097, 64
    %v1100 = vpop.permute.xlu0 %1099
    %v1102 = vadd.f32 %v1088, %v1100
    %v1103 = vtanh.pop %v1102
    %v1104 = vsub.f32 1.0, %v1092
    %1106 = vrot.lane.b32.xlu0 %v1103, 96
    %v1107 = vpop.permute.xlu0 %1106
    %v1109 = vmul.f32 %v1104, %v1107
    %v1111 = vrot.slane %v1039, 6
    %v1113 = vmul.f32 %v1092, %v1111
    %v1114 = vadd.f32 %v1109, %v1113
    %v1115 = vpack.c.bf16 %v1114, %v1114
    %1117 = vrot.lane.b32.xlu0 %v1115, 96
    %v1118 = vpop.permute.xlu0 %1117
    %v1120 = vsel %vm123, %v1118, 0
    %1122 = vmatprep.subr.bf16.mxu0 0
    %1123 = vmatpush1.bf16.msra.mxu0 %v119
    %1124 = vmatprep.subr.bf16.mxu0 0
    %1125 = vmatpush1.bf16.msra.mxu0 %v120
    %1126 = vmatprep.subr.bf16.mxu0 0
    %1127 = vmatpush1.bf16.msra.mxu0 0
    %1128 = vmatprep.subr.bf16.mxu0 0
    %1129 = vmatpush1.bf16.msra.mxu0 0
    %1130 = vmatprep.subr.bf16.mxu0 0
    %1131 = vmatpush1.bf16.msra.mxu0 0
    %1132 = vmatprep.subr.bf16.mxu0 0
    %1133 = vmatpush1.bf16.msra.mxu0 0
    %1134 = vmatprep.subr.bf16.mxu0 0
    %1135 = vmatpush1.bf16.msra.mxu0 0
    %1136 = vmatprep.subr.bf16.mxu0 0
    %1137 = vmatpush1.bf16.msra.mxu0 0
    %1138 = vmatprep.subr.bf16.mxu0 0
    %1139 = vmatpush1.bf16.msra.mxu0 0
    %1140 = vmatprep.subr.bf16.mxu0 0
    %1141 = vmatpush1.bf16.msra.mxu0 0
    %1142 = vmatprep.subr.bf16.mxu0 0
    %1143 = vmatpush1.bf16.msra.mxu0 0
    %1144 = vmatprep.subr.bf16.mxu0 0
    %1145 = vmatpush1.bf16.msra.mxu0 0
    %1146 = vmatprep.subr.bf16.mxu0 0
    %1147 = vmatpush1.bf16.msra.mxu0 0
    %1148 = vmatprep.subr.bf16.mxu0 0
    %1149 = vmatpush1.bf16.msra.mxu0 0
    %1150 = vmatprep.subr.bf16.mxu0 0
    %1151 = vmatpush1.bf16.msra.mxu0 0
    %1152 = vmatprep.subr.bf16.mxu0 0
    %1153 = vmatpush1.bf16.msra.mxu0 0
    %1154 = vmatprep.mubr.bf16.mxu0 0
    %1155 = vmatmul.mubr.bf16.gmra.mrb[0].mxu0 %v1120
    %v1156 = vpop.f32.mrb[0].mxu0
    %v1157 = vadd.f32 0.0, %v1156
    %v1158 = vpop.f32.mrb[0].mxu0
    %v1159 = vpop.f32.mrb[0].mxu0
    %v1160 = vpop.f32.mrb[0].mxu0
    %1161 = vdwg.mxu0
    %v1163 = vrot.slane %v1157, 6
    %v1165 = vadd.f32 %v104, %v1163
    %v1166 = vmul.f32 %v1165, 0.5
    %v1167 = vtanh.pop %v1166
    %v1168 = vadd.f32 %v1167, 1.0
    %v1169 = vmul.f32 %v1168, 0.5
    %1171 = vrot.lane.b32.xlu0 %v1165, 32
    %v1172 = vpop.permute.xlu0 %1171
    %v1174 = vmul.f32 %v1169, %v1172
    %1176 = vrot.lane.b32.xlu0 %v1174, 64
    %v1177 = vpop.permute.xlu0 %1176
    %v1179 = vadd.f32 %v1165, %v1177
    %v1180 = vtanh.pop %v1179
    %v1181 = vsub.f32 1.0, %v1169
    %1183 = vrot.lane.b32.xlu0 %v1180, 96
    %v1184 = vpop.permute.xlu0 %1183
    %v1186 = vmul.f32 %v1181, %v1184
    %v1188 = vrot.slane %v1114, 6
    %v1190 = vmul.f32 %v1169, %v1188
    %v1191 = vadd.f32 %v1186, %v1190
    %v1192 = vpack.c.bf16 %v1191, %v1191
    %v1194 = vrot.slane %v1192, 1
    %1195 = vrot.lane.b32.xlu0 %v1194, 96
    %v1196 = vpop.permute.xlu0 %1195
    %v1198 = vsel %vm123, %v1196, 0
    %1200 = vmatprep.subr.bf16.mxu0 0
    %1201 = vmatpush1.bf16.msra.mxu0 %v119
    %1202 = vmatprep.subr.bf16.mxu0 0
    %1203 = vmatpush1.bf16.msra.mxu0 %v120
    %1204 = vmatprep.subr.bf16.mxu0 0
    %1205 = vmatpush1.bf16.msra.mxu0 0
    %1206 = vmatprep.subr.bf16.mxu0 0
    %1207 = vmatpush1.bf16.msra.mxu0 0
    %1208 = vmatprep.subr.bf16.mxu0 0
    %1209 = vmatpush1.bf16.msra.mxu0 0
    %1210 = vmatprep.subr.bf16.mxu0 0
    %1211 = vmatpush1.bf16.msra.mxu0 0
    %1212 = vmatprep.subr.bf16.mxu0 0
    %1213 = vmatpush1.bf16.msra.mxu0 0
    %1214 = vmatprep.subr.bf16.mxu0 0
    %1215 = vmatpush1.bf16.msra.mxu0 0
    %1216 = vmatprep.subr.bf16.mxu0 0
    %1217 = vmatpush1.bf16.msra.mxu0 0
    %1218 = vmatprep.subr.bf16.mxu0 0
    %1219 = vmatpush1.bf16.msra.mxu0 0
    %1220 = vmatprep.subr.bf16.mxu0 0
    %1221 = vmatpush1.bf16.msra.mxu0 0
    %1222 = vmatprep.subr.bf16.mxu0 0
    %1223 = vmatpush1.bf16.msra.mxu0 0
    %1224 = vmatprep.subr.bf16.mxu0 0
    %1225 = vmatpush1.bf16.msra.mxu0 0
    %1226 = vmatprep.subr.bf16.mxu0 0
    %1227 = vmatpush1.bf16.msra.mxu0 0
    %1228 = vmatprep.subr.bf16.mxu0 0
    %1229 = vmatpush1.bf16.msra.mxu0 0
    %1230 = vmatprep.subr.bf16.mxu0 0
    %1231 = vmatpush1.bf16.msra.mxu0 0
    %1232 = vmatprep.mubr.bf16.mxu0 0
    %1233 = vmatmul.mubr.bf16.gmra.mrb[0].mxu0 %v1198
    %v1234 = vpop.f32.mrb[0].mxu0
    %v1235 = vadd.f32 0.0, %v1234
    %v1236 = vpop.f32.mrb[0].mxu0
    %v1237 = vpop.f32.mrb[0].mxu0
    %v1238 = vpop.f32.mrb[0].mxu0
    %1239 = vdwg.mxu0
    %v1241 = vrot.slane %v1235, 4
    %v1243 = vadd.f32 %v104, %v1241
    %v1244 = vmul.f32 %v1243, 0.5
    %v1245 = vtanh.pop %v1244
    %v1246 = vadd.f32 %v1245, 1.0
    %v1247 = vmul.f32 %v1246, 0.5
    %1249 = vrot.lane.b32.xlu0 %v1243, 32
    %v1250 = vpop.permute.xlu0 %1249
    %v1252 = vmul.f32 %v1247, %v1250
    %1254 = vrot.lane.b32.xlu0 %v1252, 64
    %v1255 = vpop.permute.xlu0 %1254
    %v1257 = vadd.f32 %v1243, %v1255
    %v1258 = vtanh.pop %v1257
    %v1259 = vsub.f32 1.0, %v1247
    %1261 = vrot.lane.b32.xlu0 %v1258, 96
    %v1262 = vpop.permute.xlu0 %1261
    %v1264 = vmul.f32 %v1259, %v1262
    %v1266 = vrot.slane %v1191, 6
    %v1268 = vmul.f32 %v1247, %v1266
    %v1269 = vadd.f32 %v1264, %v1268
    %v1270 = vpack.c.bf16 %v1269, %v1269
    %v1272 = vrot.slane %v1270, 2
    %1273 = vrot.lane.b32.xlu0 %v1272, 96
    %v1274 = vpop.permute.xlu0 %1273
    %v1276 = vsel %vm123, %v1274, 0
    %1278 = vmatprep.subr.bf16.mxu0 0
    %1279 = vmatpush1.bf16.msra.mxu0 %v119
    %1280 = vmatprep.subr.bf16.mxu0 0
    %1281 = vmatpush1.bf16.msra.mxu0 %v120
    %1282 = vmatprep.subr.bf16.mxu0 0
    %1283 = vmatpush1.bf16.msra.mxu0 0
    %1284 = vmatprep.subr.bf16.mxu0 0
    %1285 = vmatpush1.bf16.msra.mxu0 0
    %1286 = vmatprep.subr.bf16.mxu0 0
    %1287 = vmatpush1.bf16.msra.mxu0 0
    %1288 = vmatprep.subr.bf16.mxu0 0
    %1289 = vmatpush1.bf16.msra.mxu0 0
    %1290 = vmatprep.subr.bf16.mxu0 0
    %1291 = vmatpush1.bf16.msra.mxu0 0
    %1292 = vmatprep.subr.bf16.mxu0 0
    %1293 = vmatpush1.bf16.msra.mxu0 0
    %1294 = vmatprep.subr.bf16.mxu0 0
    %1295 = vmatpush1.bf16.msra.mxu0 0
    %1296 = vmatprep.subr.bf16.mxu0 0
    %1297 = vmatpush1.bf16.msra.mxu0 0
    %1298 = vmatprep.subr.bf16.mxu0 0
    %1299 = vmatpush1.bf16.msra.mxu0 0
    %1300 = vmatprep.subr.bf16.mxu0 0
    %1301 = vmatpush1.bf16.msra.mxu0 0
    %1302 = vmatprep.subr.bf16.mxu0 0
    %1303 = vmatpush1.bf16.msra.mxu0 0
    %1304 = vmatprep.subr.bf16.mxu0 0
    %1305 = vmatpush1.bf16.msra.mxu0 0
    %1306 = vmatprep.subr.bf16.mxu0 0
    %1307 = vmatpush1.bf16.msra.mxu0 0
    %1308 = vmatprep.subr.bf16.mxu0 0
    %1309 = vmatpush1.bf16.msra.mxu0 0
    %1310 = vmatprep.mubr.bf16.mxu0 0
    %1311 = vmatmul.mubr.bf16.gmra.mrb[0].mxu0 %v1276
    %v1312 = vpop.f32.mrb[0].mxu0
    %v1313 = vadd.f32 0.0, %v1312
    %v1314 = vpop.f32.mrb[0].mxu0
    %v1315 = vpop.f32.mrb[0].mxu0
    %v1316 = vpop.f32.mrb[0].mxu0
    %1317 = vdwg.mxu0
    %v1319 = vrot.slane %v1313, 2
    %v1321 = vadd.f32 %v104, %v1319
    %v1322 = vmul.f32 %v1321, 0.5
    %v1323 = vtanh.pop %v1322
    %v1324 = vadd.f32 %v1323, 1.0
    %v1325 = vmul.f32 %v1324, 0.5
    %1327 = vrot.lane.b32.xlu0 %v1321, 32
    %v1328 = vpop.permute.xlu0 %1327
    %v1330 = vmul.f32 %v1325, %v1328
    %1332 = vrot.lane.b32.xlu0 %v1330, 64
    %v1333 = vpop.permute.xlu0 %1332
    %v1335 = vadd.f32 %v1321, %v1333
    %v1336 = vtanh.pop %v1335
    %v1337 = vsub.f32 1.0, %v1325
    %1339 = vrot.lane.b32.xlu0 %v1336, 96
    %v1340 = vpop.permute.xlu0 %1339
    %v1342 = vmul.f32 %v1337, %v1340
    %v1344 = vrot.slane %v1269, 6
    %v1346 = vmul.f32 %v1325, %v1344
    %v1347 = vadd.f32 %v1342, %v1346
    %v1348 = vpack.c.bf16 %v1347, %v1347
    %v1349 = vld [vmem:[%s4] sm:$0xf]
    %v1350 = vld [vmem:[%s4 + $0x4] sm:$0xf]
    %v1351 = vld [vmem:[%s4 + $0x8] sm:$0xf]
    %v1352 = vld [vmem:[%s4 + $0xc] sm:$0xf]
    %v1353 = vld [vmem:[%s5] sm:$0x1]
    %v1355 = vlaneseq
    %v1356 = vshrl.u32 %v1355, 7
    %v1357 = vsub.s32 0, %v1356
    %v1358 = vrot.slane %v1353, %v1357
    %v1361 = vrot.slane %v1348, 3
    %1362 = vrot.lane.b32.xlu0 %v1361, 96
    %v1363 = vpop.permute.xlu0 %1362
    %v1368 = vunpack.c.l.b16 %v1349
    %v1369 = vunpack.c.l.b16 %v1350
    %v1370 = vunpack.c.l.b16 %v1351
    %v1371 = vunpack.c.l.b16 %v1352
    %v1372 = vpack.c.b16 %v1369, %v1368
    %v1373 = vpack.c.b16 %v1371, %v1370
    %v1377 = vsel %vm123, %v1363, 0
    %1379 = vmatprep.subr.bf16.mxu0 0
    %1380 = vmatpush1.bf16.msra.mxu0 %v1372
    %1381 = vmatprep.subr.bf16.mxu0 0
    %1382 = vmatpush1.bf16.msra.mxu0 %v1373
    %1383 = vmatprep.subr.bf16.mxu0 0
    %1384 = vmatpush1.bf16.msra.mxu0 0
    %1385 = vmatprep.subr.bf16.mxu0 0
    %1386 = vmatpush1.bf16.msra.mxu0 0
    %1387 = vmatprep.subr.bf16.mxu0 0
    %1388 = vmatpush1.bf16.msra.mxu0 0
    %1389 = vmatprep.subr.bf16.mxu0 0
    %1390 = vmatpush1.bf16.msra.mxu0 0
    %1391 = vmatprep.subr.bf16.mxu0 0
    %1392 = vmatpush1.bf16.msra.mxu0 0
    %1393 = vmatprep.subr.bf16.mxu0 0
    %1394 = vmatpush1.bf16.msra.mxu0 0
    %1395 = vmatprep.subr.bf16.mxu0 0
    %1396 = vmatpush1.bf16.msra.mxu0 0
    %1397 = vmatprep.subr.bf16.mxu0 0
    %1398 = vmatpush1.bf16.msra.mxu0 0
    %1399 = vmatprep.subr.bf16.mxu0 0
    %1400 = vmatpush1.bf16.msra.mxu0 0
    %1401 = vmatprep.subr.bf16.mxu0 0
    %1402 = vmatpush1.bf16.msra.mxu0 0
    %1403 = vmatprep.subr.bf16.mxu0 0
    %1404 = vmatpush1.bf16.msra.mxu0 0
    %1405 = vmatprep.subr.bf16.mxu0 0
    %1406 = vmatpush1.bf16.msra.mxu0 0
    %1407 = vmatprep.subr.bf16.mxu0 0
    %1408 = vmatpush1.bf16.msra.mxu0 0
    %1409 = vmatprep.subr.bf16.mxu0 0
    %1410 = vmatpush1.bf16.msra.mxu0 0
    %1411 = vmatprep.mubr.bf16.mxu0 0
    %1412 = vmatmul.mubr.bf16.gmra.mrb[0].mxu0 %v1377
    %v1413 = vpop.f32.mrb[0].mxu0
    %v1414 = vadd.f32 %v1358, %v1413
    %v1415 = vpop.f32.mrb[0].mxu0
    %v1416 = vpop.f32.mrb[0].mxu0
    %v1417 = vpop.f32.mrb[0].mxu0
    %1418 = vdwg.mxu0
    %vm1419 = vcmask 58368
    %v1420 = vsel %vm1419, %v1414, -inf
    %1421 = vmax.xlane.f32.xlu0 %v1420
    %v1422 = vpop.xlane.xlu0 %1421
    %v1423 = vsub.f32 %v1414, %v1422
    %v1424 = vmul.f32 %v1423, 1.442695
    %v1425 = vpow.pop %v1424
    %v1426 = vsel %vm1419, %v1425, 0.0
    %1427 = vadd.xlane.f32.xlu0 %v1426
    %v1428 = vpop.xlane.xlu0 %1427
    %v1429 = vlog2.pop %v1428
    %v1430 = vmul.f32 %v1429, 0.6931472
    %v1431 = vsub.f32 %v1423, %v1430
    %1432 = vst.msk [vmem:[#allocation2] sm:$0x3] %vm1419, %v1431
    // Predicated region
    $region26: #{tpu_custom_call.1} parent=1 // pred_check
      _
    $region27: #{tpu_custom_call.1} parent=1 // pred_check_branch
      %1434 = sbr.rel (0) target = $region29
    $region28: #{tpu_custom_call.1} parent=1 // pred_region
      %s1436 = ssub.s32 32, 32
      %1437 = vsyncadd [#allocation3], %s1436
      %s1439 = sshll.u32 [#allocation2], 4
      %s1440 = int_to_ptr.vmem [resolvable:$true] %s1439
      %1442 = dma.vmem_to_hbm [thread:$0]  %s1440, 32, %s6, [#allocation3]
    $region29: #{tpu_custom_call.1} parent=1 // pred_fallthru
      _
    // Predicated region
    $region30: #{tpu_custom_call.1} parent=1 // pred_check
      _
    $region31: #{tpu_custom_call.1} parent=1 // pred_check_branch
      %1444 = sbr.rel (0) target = $region33
    $region32: #{tpu_custom_call.1} parent=1 // pred_region
      %1445 = dma.done [#allocation3], 32
    $region33: #{tpu_custom_call.1} parent=1 // pred_fallthru
      _
    %1446 = vsyncpa [#allocation3], 1

</llo_original>
